<compile_context>
chip_gen: v6e
topology: v6e:2x2x1
jax: 0.10.0
libtpu: 0.0.40
codegen_flags: <defaults>
</compile_context>

<pallas_src>
import numpy as np
import jax
import jax.numpy as jnp
from jax.experimental import pallas as pl
from jax.experimental.pallas import tpu as pltpu

BN_EPS = 1e-5


def resblock_kernel(xpad_ref, b1_ref, b2_ref, s_ref, st_ref,
                    g1_ref, be1_ref, g2_ref, be2_ref,
                    out_ref, pad_ref):
    # xpad_ref : (N, H+2, W*C)  input, H-padded, (W,C) packed on the lane axis
    # b*_ref   : (3, W*C, W*C)  banded conv weights (one matrix per kernel row dh)
    # s_ref    : (W*C, C)       lane -> channel selection matrix
    # st_ref   : (C, W*C)       channel -> lane broadcast matrix (s_ref transposed)
    # g*/be*   : (1, C)         BN gamma / beta
    # out_ref  : (N*H, W*C)     lane-dense output rows
    # pad_ref  : (N, H+2, W*C)  VMEM scratch: H-padded intermediate
    N, Hp, L = xpad_ref.shape
    H = Hp - 2
    C = s_ref.shape[1]
    W = L // C
    M = N * H
    inv_cnt = 1.0 / float(M * W)          # 1 / (N*H*W), per-channel element count

    def conv3(src_ref, b_ref):
        # 3x3 conv as 3 lane-dense matmuls; W taps + W padding are folded into b_ref.
        acc = jnp.zeros((M, L), jnp.float32)
        for dh in range(3):                                   # static unroll
            rows = src_ref[:, dh:dh + H, :].reshape(M, L)
            acc = acc + jnp.dot(rows, b_ref[dh],
                                preferred_element_type=jnp.float32)
        return acc

    def bn_relu(acc, g_ref, b_ref):
        # Fused training-mode BN: single pass for sum / sum-of-squares, tiny
        # matmuls for the lane<->channel reductions/broadcasts, then FMA + ReLU.
        colsum = jnp.sum(acc, axis=0, keepdims=True)          # (1, L)
        colsq = jnp.sum(acc * acc, axis=0, keepdims=True)     # (1, L)
        mean_c = jnp.dot(colsum, s_ref[...],
                         preferred_element_type=jnp.float32) * inv_cnt   # (1, C)
        ex2_c = jnp.dot(colsq, s_ref[...],
                        preferred_element_type=jnp.float32) * inv_cnt    # (1, C)
        var_c = ex2_c - mean_c * mean_c
        scale_c = g_ref[...] * jax.lax.rsqrt(var_c + BN_EPS)             # (1, C)
        shift_c = b_ref[...] - mean_c * scale_c                          # (1, C)
        scale_l = jnp.dot(scale_c, st_ref[...],
                          preferred_element_type=jnp.float32)            # (1, L)
        shift_l = jnp.dot(shift_c, st_ref[...],
                          preferred_element_type=jnp.float32)            # (1, L)
        return jnp.maximum(acc * scale_l + shift_l, 0.0)

    # ---- conv1 + BN1 + ReLU ----
    y1 = bn_relu(conv3(xpad_ref, b1_ref), g1_ref, be1_ref)               # (M, L)

    # ---- H-pad y1 into scratch: zero only the two border rows ----
    pad_ref[:, 0:1, :] = jnp.zeros((N, 1, L), jnp.float32)
    pad_ref[:, H + 1:H + 2, :] = jnp.zeros((N, 1, L), jnp.float32)
    pad_ref[:, 1:H + 1, :] = y1.reshape(N, H, L)

    # ---- conv2 + BN2 + ReLU ----
    y2 = bn_relu(conv3(pad_ref, b2_ref), g2_ref, be2_ref)                # (M, L)

    # ---- residual add + final ReLU, single lane-dense store ----
    resid = xpad_ref[:, 1:H + 1, :].reshape(M, L)
    out_ref[...] = jnp.maximum(resid + y2, 0.0).astype(out_ref.dtype)


def _banded_weights(w_oihw, W):
    """Fold the W-direction taps (and W zero-padding) of a 3x3 conv into
    3 banded matrices of shape (W*Cin, W*Cout), one per kernel row dh."""
    w = np.asarray(w_oihw, dtype=np.float32)                  # (Cout, Cin, 3, 3)
    Cout, Cin, KH, KW = w.shape
    B = np.zeros((KH, W * Cin, W * Cout), np.float32)
    for dh in range(KH):
        for dw in range(KW):
            blk = w[:, :, dh, dw].T                           # (Cin, Cout)
            for wo in range(W):
                wi = wo + dw - 1                              # padded-W tap -> input col
                if 0 <= wi < W:
                    B[dh, wi * Cin:(wi + 1) * Cin, wo * Cout:(wo + 1) * Cout] = blk
    return jnp.asarray(B)


def residual_block_forward(x_nchw, params):
    """x_nchw: (N, C, H, W) float32.  params: (w1, g1, b1, w2, g2, b2) in PyTorch
    layouts (conv weights OIHW, BN vectors of length C)."""
    w1, g1, b1, w2, g2, b2 = params
    N, Cin, H, W = x_nchw.shape
    Cout = w1.shape[0]
    assert Cin == Cout, "same_shape=True requires in_channel == out_channel"
    C = Cin
    L = W * C

    # Layout plumbing in the wrapper: NHWC, pack (W, C) onto the lane axis,
    # pad H by one row on each side (W padding lives inside the banded weights).
    x_rows = jnp.transpose(x_nchw, (0, 2, 3, 1)).astype(jnp.float32).reshape(N, H, L)
    xpad = jnp.pad(x_rows, ((0, 0), (1, 1), (0, 0)))

    B1 = _banded_weights(w1, W)
    B2 = _banded_weights(w2, W)
    s_np = np.tile(np.eye(C, dtype=np.float32), (W, 1))       # (L, C)
    S = jnp.asarray(s_np)
    ST = jnp.asarray(np.ascontiguousarray(s_np.T))            # (C, L)

    out2d = pl.pallas_call(
        resblock_kernel,
        out_shape=jax.ShapeDtypeStruct((N * H, L), jnp.float32),
        in_specs=[pl.BlockSpec(memory_space=pltpu.MemorySpace.VMEM)] * 9,
        out_specs=pl.BlockSpec(memory_space=pltpu.MemorySpace.VMEM),
        scratch_shapes=[pltpu.VMEM((N, H + 2, L), jnp.float32)],
    )(xpad, B1, B2, S, ST,
      g1.reshape(1, C).astype(jnp.float32), b1.reshape(1, C).astype(jnp.float32),
      g2.reshape(1, C).astype(jnp.float32), b2.reshape(1, C).astype(jnp.float32))

    out = out2d.reshape(N, H, W, C)
    return jnp.transpose(out, (0, 3, 1, 2))                   # back to NCHW


def reference_forward(x_nchw, params):
    """Plain-JAX reference mirroring the PyTorch forward (training-mode BN)."""
    w1, g1, b1, w2, g2, b2 = params

    def conv(x, w):
        return jax.lax.conv_general_dilated(
            x, w, window_strides=(1, 1), padding=((1, 1), (1, 1)),
            dimension_numbers=("NCHW", "OIHW", "NCHW"))

    def bn(x, g, b):
        mean = x.mean(axis=(0, 2, 3), keepdims=True)
        var = ((x - mean) ** 2).mean(axis=(0, 2, 3), keepdims=True)
        return ((x - mean) * jax.lax.rsqrt(var + BN_EPS)
                * g.reshape(1, -1, 1, 1) + b.reshape(1, -1, 1, 1))

    out = jax.nn.relu(bn(conv(x_nchw, w1), g1, b1))
    out = jax.nn.relu(bn(conv(out, w2), g2, b2))
    return jax.nn.relu(x_nchw + out)


if __name__ == "__main__":
    N, C, H, W = 2, 8, 16, 16   # in_channel = out_channel = 8 -> W*C = 128 lanes

    key = jax.random.PRNGKey(0)
    k1, k2, k3, k4, k5, k6, kx = jax.random.split(key, 7)
    w1 = 0.1 * jax.random.normal(k1, (C, C, 3, 3), jnp.float32)   # OIHW
    w2 = 0.1 * jax.random.normal(k2, (C, C, 3, 3), jnp.float32)
    g1 = 1.0 + 0.1 * jax.random.normal(k3, (C,), jnp.float32)
    b1 = 0.1 * jax.random.normal(k4, (C,), jnp.float32)
    g2 = 1.0 + 0.1 * jax.random.normal(k5, (C,), jnp.float32)
    b2 = 0.1 * jax.random.normal(k6, (C,), jnp.float32)
    params = (w1, g1, b1, w2, g2, b2)

    x = jax.random.normal(kx, (N, C, H, W), jnp.float32)

    y = jax.block_until_ready(residual_block_forward(x, params))
    y_ref = jax.block_until_ready(reference_forward(x, params))

    assert y.shape == (N, C, H, W)
    assert jnp.allclose(y, y_ref, atol=2e-3, rtol=2e-3), (
        float(jnp.max(jnp.abs(y - y_ref))))

    print("KERNEL_OK")
</pallas_src>

<mosaic_0001>
module attributes {stable_mosaic.version = 11 : i64} {
  func.func @resblock_kernel(%arg0: memref<2x18x128xf32, #tpu.memory_space<vmem>>, %arg1: memref<3x128x128xf32, #tpu.memory_space<vmem>>, %arg2: memref<3x128x128xf32, #tpu.memory_space<vmem>>, %arg3: memref<128x8xf32, #tpu.memory_space<vmem>>, %arg4: memref<8x128xf32, #tpu.memory_space<vmem>>, %arg5: memref<1x8xf32, #tpu.memory_space<vmem>>, %arg6: memref<1x8xf32, #tpu.memory_space<vmem>>, %arg7: memref<1x8xf32, #tpu.memory_space<vmem>>, %arg8: memref<1x8xf32, #tpu.memory_space<vmem>>, %arg9: memref<32x128xf32, #tpu.memory_space<vmem>>, %arg10: memref<2x18x128xf32, #tpu.memory_space<vmem>>) attributes {dimension_semantics = [], scalar_prefetch = 0 : i64, scratch_operands = 1 : i64, tpu.core_type = #tpu.core_type<tc>} {
    %cst = arith.constant 0.000000e+00 : f32
    %0 = vector.broadcast %cst : f32 to vector<32x128xf32>
    %c0 = arith.constant 0 : index
    %c0_0 = arith.constant 0 : index
    %c0_1 = arith.constant 0 : index
    %1 = vector.load %arg0[%c0, %c0_0, %c0_1] : memref<2x18x128xf32, #tpu.memory_space<vmem>>, vector<2x16x128xf32>
    %2 = vector.shape_cast %1 : vector<2x16x128xf32> to vector<32x128xf32>
    %c0_2 = arith.constant 0 : index
    %c0_3 = arith.constant 0 : index
    %c0_4 = arith.constant 0 : index
    %3 = vector.load %arg1[%c0_2, %c0_3, %c0_4] : memref<3x128x128xf32, #tpu.memory_space<vmem>>, vector<1x128x128xf32>
    %4 = vector.shape_cast %3 : vector<1x128x128xf32> to vector<128x128xf32>
    %cst_5 = arith.constant dense<0.000000e+00> : vector<32x128xf32>
    %5 = tpu.matmul %2, %4, %cst_5 {dimension_numbers = #tpu.dot_dimension_numbers<[1], [0], [0], [1], [0, 0, 1, 1], [], []>} : vector<32x128xf32>, vector<128x128xf32>, vector<32x128xf32> -> vector<32x128xf32>
    %6 = arith.addf %0, %5 : vector<32x128xf32>
    %c0_6 = arith.constant 0 : index
    %c1 = arith.constant 1 : index
    %c0_7 = arith.constant 0 : index
    %7 = vector.load %arg0[%c0_6, %c1, %c0_7] : memref<2x18x128xf32, #tpu.memory_space<vmem>>, vector<2x16x128xf32>
    %8 = vector.shape_cast %7 : vector<2x16x128xf32> to vector<32x128xf32>
    %c1_8 = arith.constant 1 : index
    %c0_9 = arith.constant 0 : index
    %c0_10 = arith.constant 0 : index
    %9 = vector.load %arg1[%c1_8, %c0_9, %c0_10] : memref<3x128x128xf32, #tpu.memory_space<vmem>>, vector<1x128x128xf32>
    %10 = vector.shape_cast %9 : vector<1x128x128xf32> to vector<128x128xf32>
    %cst_11 = arith.constant dense<0.000000e+00> : vector<32x128xf32>
    %11 = tpu.matmul %8, %10, %cst_11 {dimension_numbers = #tpu.dot_dimension_numbers<[1], [0], [0], [1], [0, 0, 1, 1], [], []>} : vector<32x128xf32>, vector<128x128xf32>, vector<32x128xf32> -> vector<32x128xf32>
    %12 = arith.addf %6, %11 : vector<32x128xf32>
    %c0_12 = arith.constant 0 : index
    %c2 = arith.constant 2 : index
    %c0_13 = arith.constant 0 : index
    %13 = vector.load %arg0[%c0_12, %c2, %c0_13] : memref<2x18x128xf32, #tpu.memory_space<vmem>>, vector<2x16x128xf32>
    %14 = vector.shape_cast %13 : vector<2x16x128xf32> to vector<32x128xf32>
    %c2_14 = arith.constant 2 : index
    %c0_15 = arith.constant 0 : index
    %c0_16 = arith.constant 0 : index
    %15 = vector.load %arg1[%c2_14, %c0_15, %c0_16] : memref<3x128x128xf32, #tpu.memory_space<vmem>>, vector<1x128x128xf32>
    %16 = vector.shape_cast %15 : vector<1x128x128xf32> to vector<128x128xf32>
    %cst_17 = arith.constant dense<0.000000e+00> : vector<32x128xf32>
    %17 = tpu.matmul %14, %16, %cst_17 {dimension_numbers = #tpu.dot_dimension_numbers<[1], [0], [0], [1], [0, 0, 1, 1], [], []>} : vector<32x128xf32>, vector<128x128xf32>, vector<32x128xf32> -> vector<32x128xf32>
    %18 = arith.addf %12, %17 : vector<32x128xf32>
    %cst_18 = arith.constant dense<0.000000e+00> : vector<128xf32>
    %19 = vector.multi_reduction <add>, %18, %cst_18 [0] : vector<32x128xf32> to vector<128xf32>
    %20 = vector.shape_cast %19 : vector<128xf32> to vector<1x128xf32>
    %21 = arith.mulf %18, %18 : vector<32x128xf32>
    %cst_19 = arith.constant dense<0.000000e+00> : vector<128xf32>
    %22 = vector.multi_reduction <add>, %21, %cst_19 [0] : vector<32x128xf32> to vector<128xf32>
    %23 = vector.shape_cast %22 : vector<128xf32> to vector<1x128xf32>
    %c0_20 = arith.constant 0 : index
    %c0_21 = arith.constant 0 : index
    %24 = vector.load %arg3[%c0_20, %c0_21] : memref<128x8xf32, #tpu.memory_space<vmem>>, vector<128x8xf32>
    %cst_22 = arith.constant dense<0.000000e+00> : vector<1x8xf32>
    %25 = tpu.matmul %20, %24, %cst_22 {dimension_numbers = #tpu.dot_dimension_numbers<[1], [0], [0], [1], [0, 0, 1, 1], [], []>} : vector<1x128xf32>, vector<128x8xf32>, vector<1x8xf32> -> vector<1x8xf32>
    %cst_23 = arith.constant 0.001953125 : f32
    %26 = vector.broadcast %cst_23 : f32 to vector<1x8xf32>
    %27 = arith.mulf %25, %26 : vector<1x8xf32>
    %c0_24 = arith.constant 0 : index
    %c0_25 = arith.constant 0 : index
    %28 = vector.load %arg3[%c0_24, %c0_25] : memref<128x8xf32, #tpu.memory_space<vmem>>, vector<128x8xf32>
    %cst_26 = arith.constant dense<0.000000e+00> : vector<1x8xf32>
    %29 = tpu.matmul %23, %28, %cst_26 {dimension_numbers = #tpu.dot_dimension_numbers<[1], [0], [0], [1], [0, 0, 1, 1], [], []>} : vector<1x128xf32>, vector<128x8xf32>, vector<1x8xf32> -> vector<1x8xf32>
    %cst_27 = arith.constant 0.001953125 : f32
    %30 = vector.broadcast %cst_27 : f32 to vector<1x8xf32>
    %31 = arith.mulf %29, %30 : vector<1x8xf32>
    %32 = arith.mulf %27, %27 : vector<1x8xf32>
    %33 = arith.subf %31, %32 : vector<1x8xf32>
    %c0_28 = arith.constant 0 : index
    %c0_29 = arith.constant 0 : index
    %34 = vector.load %arg5[%c0_28, %c0_29] : memref<1x8xf32, #tpu.memory_space<vmem>>, vector<1x8xf32>
    %cst_30 = arith.constant 9.99999974E-6 : f32
    %35 = vector.broadcast %cst_30 : f32 to vector<1x8xf32>
    %36 = arith.addf %33, %35 : vector<1x8xf32>
    %37 = math.rsqrt %36 : vector<1x8xf32>
    %38 = arith.mulf %34, %37 : vector<1x8xf32>
    %c0_31 = arith.constant 0 : index
    %c0_32 = arith.constant 0 : index
    %39 = vector.load %arg6[%c0_31, %c0_32] : memref<1x8xf32, #tpu.memory_space<vmem>>, vector<1x8xf32>
    %40 = arith.mulf %27, %38 : vector<1x8xf32>
    %41 = arith.subf %39, %40 : vector<1x8xf32>
    %c0_33 = arith.constant 0 : index
    %c0_34 = arith.constant 0 : index
    %42 = vector.load %arg4[%c0_33, %c0_34] : memref<8x128xf32, #tpu.memory_space<vmem>>, vector<8x128xf32>
    %cst_35 = arith.constant dense<0.000000e+00> : vector<1x128xf32>
    %43 = tpu.matmul %38, %42, %cst_35 {dimension_numbers = #tpu.dot_dimension_numbers<[1], [0], [0], [1], [0, 0, 1, 1], [], []>} : vector<1x8xf32>, vector<8x128xf32>, vector<1x128xf32> -> vector<1x128xf32>
    %c0_36 = arith.constant 0 : index
    %c0_37 = arith.constant 0 : index
    %44 = vector.load %arg4[%c0_36, %c0_37] : memref<8x128xf32, #tpu.memory_space<vmem>>, vector<8x128xf32>
    %cst_38 = arith.constant dense<0.000000e+00> : vector<1x128xf32>
    %45 = tpu.matmul %41, %44, %cst_38 {dimension_numbers = #tpu.dot_dimension_numbers<[1], [0], [0], [1], [0, 0, 1, 1], [], []>} : vector<1x8xf32>, vector<8x128xf32>, vector<1x128xf32> -> vector<1x128xf32>
    %46 = vector.broadcast %43 : vector<1x128xf32> to vector<32x128xf32>
    %47 = arith.mulf %18, %46 : vector<32x128xf32>
    %48 = vector.broadcast %45 : vector<1x128xf32> to vector<32x128xf32>
    %49 = arith.addf %47, %48 : vector<32x128xf32>
    %cst_39 = arith.constant 0.000000e+00 : f32
    %50 = vector.broadcast %cst_39 : f32 to vector<32x128xf32>
    %51 = arith.maximumf %49, %50 : vector<32x128xf32>
    %cst_40 = arith.constant 0.000000e+00 : f32
    %52 = vector.broadcast %cst_40 : f32 to vector<2x1x128xf32>
    %c0_41 = arith.constant 0 : index
    %c0_42 = arith.constant 0 : index
    %c0_43 = arith.constant 0 : index
    %53 = vector.load %arg10[%c0_41, %c0_42, %c0_43] : memref<2x18x128xf32, #tpu.memory_space<vmem>>, vector<2x1x128xf32>
    tpu.vector_store %arg10[%c0_41, %c0_42, %c0_43], %52 {strides = array<i32>} : memref<2x18x128xf32, #tpu.memory_space<vmem>>, vector<2x1x128xf32>,
    %cst_44 = arith.constant 0.000000e+00 : f32
    %54 = vector.broadcast %cst_44 : f32 to vector<2x1x128xf32>
    %c0_45 = arith.constant 0 : index
    %c17 = arith.constant 17 : index
    %c0_46 = arith.constant 0 : index
    %55 = vector.load %arg10[%c0_45, %c17, %c0_46] : memref<2x18x128xf32, #tpu.memory_space<vmem>>, vector<2x1x128xf32>
    tpu.vector_store %arg10[%c0_45, %c17, %c0_46], %54 {strides = array<i32>} : memref<2x18x128xf32, #tpu.memory_space<vmem>>, vector<2x1x128xf32>,
    %56 = vector.shape_cast %51 : vector<32x128xf32> to vector<2x16x128xf32>
    %c0_47 = arith.constant 0 : index
    %c1_48 = arith.constant 1 : index
    %c0_49 = arith.constant 0 : index
    %57 = vector.load %arg10[%c0_47, %c1_48, %c0_49] : memref<2x18x128xf32, #tpu.memory_space<vmem>>, vector<2x16x128xf32>
    tpu.vector_store %arg10[%c0_47, %c1_48, %c0_49], %56 {strides = array<i32>} : memref<2x18x128xf32, #tpu.memory_space<vmem>>, vector<2x16x128xf32>,
    %cst_50 = arith.constant 0.000000e+00 : f32
    %58 = vector.broadcast %cst_50 : f32 to vector<32x128xf32>
    %c0_51 = arith.constant 0 : index
    %c0_52 = arith.constant 0 : index
    %c0_53 = arith.constant 0 : index
    %59 = vector.load %arg10[%c0_51, %c0_52, %c0_53] : memref<2x18x128xf32, #tpu.memory_space<vmem>>, vector<2x16x128xf32>
    %60 = vector.shape_cast %59 : vector<2x16x128xf32> to vector<32x128xf32>
    %c0_54 = arith.constant 0 : index
    %c0_55 = arith.constant 0 : index
    %c0_56 = arith.constant 0 : index
    %61 = vector.load %arg2[%c0_54, %c0_55, %c0_56] : memref<3x128x128xf32, #tpu.memory_space<vmem>>, vector<1x128x128xf32>
    %62 = vector.shape_cast %61 : vector<1x128x128xf32> to vector<128x128xf32>
    %cst_57 = arith.constant dense<0.000000e+00> : vector<32x128xf32>
    %63 = tpu.matmul %60, %62, %cst_57 {dimension_numbers = #tpu.dot_dimension_numbers<[1], [0], [0], [1], [0, 0, 1, 1], [], []>} : vector<32x128xf32>, vector<128x128xf32>, vector<32x128xf32> -> vector<32x128xf32>
    %64 = arith.addf %58, %63 : vector<32x128xf32>
    %c0_58 = arith.constant 0 : index
    %c1_59 = arith.constant 1 : index
    %c0_60 = arith.constant 0 : index
    %65 = vector.load %arg10[%c0_58, %c1_59, %c0_60] : memref<2x18x128xf32, #tpu.memory_space<vmem>>, vector<2x16x128xf32>
    %66 = vector.shape_cast %65 : vector<2x16x128xf32> to vector<32x128xf32>
    %c1_61 = arith.constant 1 : index
    %c0_62 = arith.constant 0 : index
    %c0_63 = arith.constant 0 : index
    %67 = vector.load %arg2[%c1_61, %c0_62, %c0_63] : memref<3x128x128xf32, #tpu.memory_space<vmem>>, vector<1x128x128xf32>
    %68 = vector.shape_cast %67 : vector<1x128x128xf32> to vector<128x128xf32>
    %cst_64 = arith.constant dense<0.000000e+00> : vector<32x128xf32>
    %69 = tpu.matmul %66, %68, %cst_64 {dimension_numbers = #tpu.dot_dimension_numbers<[1], [0], [0], [1], [0, 0, 1, 1], [], []>} : vector<32x128xf32>, vector<128x128xf32>, vector<32x128xf32> -> vector<32x128xf32>
    %70 = arith.addf %64, %69 : vector<32x128xf32>
    %c0_65 = arith.constant 0 : index
    %c2_66 = arith.constant 2 : index
    %c0_67 = arith.constant 0 : index
    %71 = vector.load %arg10[%c0_65, %c2_66, %c0_67] : memref<2x18x128xf32, #tpu.memory_space<vmem>>, vector<2x16x128xf32>
    %72 = vector.shape_cast %71 : vector<2x16x128xf32> to vector<32x128xf32>
    %c2_68 = arith.constant 2 : index
    %c0_69 = arith.constant 0 : index
    %c0_70 = arith.constant 0 : index
    %73 = vector.load %arg2[%c2_68, %c0_69, %c0_70] : memref<3x128x128xf32, #tpu.memory_space<vmem>>, vector<1x128x128xf32>
    %74 = vector.shape_cast %73 : vector<1x128x128xf32> to vector<128x128xf32>
    %cst_71 = arith.constant dense<0.000000e+00> : vector<32x128xf32>
    %75 = tpu.matmul %72, %74, %cst_71 {dimension_numbers = #tpu.dot_dimension_numbers<[1], [0], [0], [1], [0, 0, 1, 1], [], []>} : vector<32x128xf32>, vector<128x128xf32>, vector<32x128xf32> -> vector<32x128xf32>
    %76 = arith.addf %70, %75 : vector<32x128xf32>
    %cst_72 = arith.constant dense<0.000000e+00> : vector<128xf32>
    %77 = vector.multi_reduction <add>, %76, %cst_72 [0] : vector<32x128xf32> to vector<128xf32>
    %78 = vector.shape_cast %77 : vector<128xf32> to vector<1x128xf32>
    %79 = arith.mulf %76, %76 : vector<32x128xf32>
    %cst_73 = arith.constant dense<0.000000e+00> : vector<128xf32>
    %80 = vector.multi_reduction <add>, %79, %cst_73 [0] : vector<32x128xf32> to vector<128xf32>
    %81 = vector.shape_cast %80 : vector<128xf32> to vector<1x128xf32>
    %c0_74 = arith.constant 0 : index
    %c0_75 = arith.constant 0 : index
    %82 = vector.load %arg3[%c0_74, %c0_75] : memref<128x8xf32, #tpu.memory_space<vmem>>, vector<128x8xf32>
    %cst_76 = arith.constant dense<0.000000e+00> : vector<1x8xf32>
    %83 = tpu.matmul %78, %82, %cst_76 {dimension_numbers = #tpu.dot_dimension_numbers<[1], [0], [0], [1], [0, 0, 1, 1], [], []>} : vector<1x128xf32>, vector<128x8xf32>, vector<1x8xf32> -> vector<1x8xf32>
    %cst_77 = arith.constant 0.001953125 : f32
    %84 = vector.broadcast %cst_77 : f32 to vector<1x8xf32>
    %85 = arith.mulf %83, %84 : vector<1x8xf32>
    %c0_78 = arith.constant 0 : index
    %c0_79 = arith.constant 0 : index
    %86 = vector.load %arg3[%c0_78, %c0_79] : memref<128x8xf32, #tpu.memory_space<vmem>>, vector<128x8xf32>
    %cst_80 = arith.constant dense<0.000000e+00> : vector<1x8xf32>
    %87 = tpu.matmul %81, %86, %cst_80 {dimension_numbers = #tpu.dot_dimension_numbers<[1], [0], [0], [1], [0, 0, 1, 1], [], []>} : vector<1x128xf32>, vector<128x8xf32>, vector<1x8xf32> -> vector<1x8xf32>
    %cst_81 = arith.constant 0.001953125 : f32
    %88 = vector.broadcast %cst_81 : f32 to vector<1x8xf32>
    %89 = arith.mulf %87, %88 : vector<1x8xf32>
    %90 = arith.mulf %85, %85 : vector<1x8xf32>
    %91 = arith.subf %89, %90 : vector<1x8xf32>
    %c0_82 = arith.constant 0 : index
    %c0_83 = arith.constant 0 : index
    %92 = vector.load %arg7[%c0_82, %c0_83] : memref<1x8xf32, #tpu.memory_space<vmem>>, vector<1x8xf32>
    %cst_84 = arith.constant 9.99999974E-6 : f32
    %93 = vector.broadcast %cst_84 : f32 to vector<1x8xf32>
    %94 = arith.addf %91, %93 : vector<1x8xf32>
    %95 = math.rsqrt %94 : vector<1x8xf32>
    %96 = arith.mulf %92, %95 : vector<1x8xf32>
    %c0_85 = arith.constant 0 : index
    %c0_86 = arith.constant 0 : index
    %97 = vector.load %arg8[%c0_85, %c0_86] : memref<1x8xf32, #tpu.memory_space<vmem>>, vector<1x8xf32>
    %98 = arith.mulf %85, %96 : vector<1x8xf32>
    %99 = arith.subf %97, %98 : vector<1x8xf32>
    %c0_87 = arith.constant 0 : index
    %c0_88 = arith.constant 0 : index
    %100 = vector.load %arg4[%c0_87, %c0_88] : memref<8x128xf32, #tpu.memory_space<vmem>>, vector<8x128xf32>
    %cst_89 = arith.constant dense<0.000000e+00> : vector<1x128xf32>
    %101 = tpu.matmul %96, %100, %cst_89 {dimension_numbers = #tpu.dot_dimension_numbers<[1], [0], [0], [1], [0, 0, 1, 1], [], []>} : vector<1x8xf32>, vector<8x128xf32>, vector<1x128xf32> -> vector<1x128xf32>
    %c0_90 = arith.constant 0 : index
    %c0_91 = arith.constant 0 : index
    %102 = vector.load %arg4[%c0_90, %c0_91] : memref<8x128xf32, #tpu.memory_space<vmem>>, vector<8x128xf32>
    %cst_92 = arith.constant dense<0.000000e+00> : vector<1x128xf32>
    %103 = tpu.matmul %99, %102, %cst_92 {dimension_numbers = #tpu.dot_dimension_numbers<[1], [0], [0], [1], [0, 0, 1, 1], [], []>} : vector<1x8xf32>, vector<8x128xf32>, vector<1x128xf32> -> vector<1x128xf32>
    %104 = vector.broadcast %101 : vector<1x128xf32> to vector<32x128xf32>
    %105 = arith.mulf %76, %104 : vector<32x128xf32>
    %106 = vector.broadcast %103 : vector<1x128xf32> to vector<32x128xf32>
    %107 = arith.addf %105, %106 : vector<32x128xf32>
    %cst_93 = arith.constant 0.000000e+00 : f32
    %108 = vector.broadcast %cst_93 : f32 to vector<32x128xf32>
    %109 = arith.maximumf %107, %108 : vector<32x128xf32>
    %c0_94 = arith.constant 0 : index
    %c1_95 = arith.constant 1 : index
    %c0_96 = arith.constant 0 : index
    %110 = vector.load %arg0[%c0_94, %c1_95, %c0_96] : memref<2x18x128xf32, #tpu.memory_space<vmem>>, vector<2x16x128xf32>
    %111 = vector.shape_cast %110 : vector<2x16x128xf32> to vector<32x128xf32>
    %112 = arith.addf %111, %109 : vector<32x128xf32>
    %cst_97 = arith.constant 0.000000e+00 : f32
    %113 = vector.broadcast %cst_97 : f32 to vector<32x128xf32>
    %114 = arith.maximumf %112, %113 : vector<32x128xf32>
    %c0_98 = arith.constant 0 : index
    %c0_99 = arith.constant 0 : index
    %115 = vector.load %arg9[%c0_98, %c0_99] : memref<32x128xf32, #tpu.memory_space<vmem>>, vector<32x128xf32>
    tpu.vector_store %arg9[%c0_98, %c0_99], %114 {strides = array<i32>} : memref<32x128xf32, #tpu.memory_space<vmem>>, vector<32x128xf32>,
    return
  }
}

</mosaic_0001>

<llo_original>
// kernel: tpu_custom_call.1
$region0: #{tpu_custom_call.1}
  #allocation0 [shape = 'u32[]', space=smem, size = 0x4, offset = 0x4, fixed_abs, tag = 'smem constant byte address 0x4 - core index']
  #allocation1 [shape = 'u32[144,128]{1,0:T(1,128)}', space=vmem, size = 0x12000, scoped, tag = 'internal scratch']
  #allocation2 [shape = 'f32[2,18,128]{2,1,0:T(8,128)}', space=vmem, size = 0x6000, scoped, tag = 'scratch operand']
  %s0 = inlined_call_operand.vmem [shape: f32[2,18,128], index: 0, kind: input, shape index: {}]
  %s1 = inlined_call_operand.hbm [shape: f32[3,128,128], index: 1, kind: input, shape index: {}]
  %s2 = inlined_call_operand.hbm [shape: f32[3,128,128], index: 2, kind: input, shape index: {}]
  %s3 = inlined_call_operand.vmem [shape: f32[128,8], index: 3, kind: input, shape index: {}]
  %s4 = inlined_call_operand.vmem [shape: f32[8,128], index: 4, kind: input, shape index: {}]
  %s5 = inlined_call_operand.vmem [shape: f32[1,8], index: 5, kind: input, shape index: {}]
  %s6 = inlined_call_operand.vmem [shape: f32[1,8], index: 6, kind: input, shape index: {}]
  %s7 = inlined_call_operand.vmem [shape: f32[1,8], index: 7, kind: input, shape index: {}]
  %s8 = inlined_call_operand.vmem [shape: f32[1,8], index: 8, kind: input, shape index: {}]
  %s9 = inlined_call_operand.hbm [shape: f32[32,128], index: 9, kind: output, shape index: {}]
  %s10 = sld [smem:[#allocation0]]
  $region54: #{tpu_custom_call.1} parent=0
    _
  %s12 = ssub.s32 1, %s10
  %s13 = scalar_select 0, %s12, %s10
  $region1: #{tpu_custom_call.1} parent=0
    #allocation3 [shape = 'u8[196608]{0}', space=vmem, size = 0x30000, scoped, tag = 'input window, operand 1, single buffered']
    #allocation4 [shape = 's32[1]{0}', space=sflag, size = 0x4, scoped, tag = 'scoped memory for tpu_custom_call.1']
    #allocation5 [shape = 's32[1]{0}', space=sflag, size = 0x4, scoped, tag = 'scoped memory for tpu_custom_call.1']
    #allocation6 [shape = 'u8[196608]{0}', space=vmem, size = 0x30000, scoped, tag = 'input window, operand 2, single buffered']
    #allocation7 [shape = 's32[1]{0}', space=sflag, size = 0x4, scoped, tag = 'scoped memory for tpu_custom_call.1']
    #allocation8 [shape = 'u8[16384]{0}', space=vmem, size = 0x4000, scoped, tag = 'output window, operand 0, single buffered']
    %14 = vsyncpa [#allocation4], 0
    %15 = vsyncpa [#allocation7], 0
    %16 = vsyncpa [#allocation5], 0
    // Predicated region
    $region2: #{tpu_custom_call.1} parent=1 // pred_check
      _
    $region3: #{tpu_custom_call.1} parent=1 // pred_check_branch
      %18 = sbr.rel (0) target = $region5
    $region4: #{tpu_custom_call.1} parent=1 // pred_region
      _
    $region5: #{tpu_custom_call.1} parent=1 // pred_fallthru
      _
    // Predicated region
    $region6: #{tpu_custom_call.1} parent=1 // pred_check
      _
    $region7: #{tpu_custom_call.1} parent=1 // pred_check_branch
      %20 = sbr.rel (0) target = $region9
    $region8: #{tpu_custom_call.1} parent=1 // pred_region
      %s22 = ssub.s32 6144, 6144
      %23 = vsyncadd [#allocation4], %s22
      %s24 = sshll.u32 [#allocation3], 4
      %s25 = int_to_ptr.vmem [resolvable:$true] %s24
      %30 = dma.hbm_to_vmem [thread:$0]  %s1, 6144, %s25, [#allocation4], 128, 128, 8
    $region9: #{tpu_custom_call.1} parent=1 // pred_fallthru
      _
    // Predicated region
    $region10: #{tpu_custom_call.1} parent=1 // pred_check
      _
    $region11: #{tpu_custom_call.1} parent=1 // pred_check_branch
      %32 = sbr.rel (0) target = $region13
    $region12: #{tpu_custom_call.1} parent=1 // pred_region
      %s34 = ssub.s32 6144, 6144
      %35 = vsyncadd [#allocation7], %s34
      %s36 = sshll.u32 [#allocation6], 4
      %s37 = int_to_ptr.vmem [resolvable:$true] %s36
      %42 = dma.hbm_to_vmem [thread:$0]  %s2, 6144, %s37, [#allocation7], 128, 128, 8
    $region13: #{tpu_custom_call.1} parent=1 // pred_fallthru
      _
    // Predicated region
    $region14: #{tpu_custom_call.1} parent=1 // pred_check
      _
    $region15: #{tpu_custom_call.1} parent=1 // pred_check_branch
      %44 = sbr.rel (0) target = $region17
    $region16: #{tpu_custom_call.1} parent=1 // pred_region
      _
    $region17: #{tpu_custom_call.1} parent=1 // pred_fallthru
      _
    // Predicated region
    $region18: #{tpu_custom_call.1} parent=1 // pred_check
      _
    $region19: #{tpu_custom_call.1} parent=1 // pred_check_branch
      %46 = sbr.rel (0) target = $region21
    $region20: #{tpu_custom_call.1} parent=1 // pred_region
      _
    $region21: #{tpu_custom_call.1} parent=1 // pred_fallthru
      _
    // Predicated region
    $region22: #{tpu_custom_call.1} parent=1 // pred_check
      _
    $region23: #{tpu_custom_call.1} parent=1 // pred_check_branch
      %48 = sbr.rel (0) target = $region25
    $region24: #{tpu_custom_call.1} parent=1 // pred_region
      _
    $region25: #{tpu_custom_call.1} parent=1 // pred_fallthru
      _
    // Predicated region
    $region26: #{tpu_custom_call.1} parent=1 // pred_check
      _
    $region27: #{tpu_custom_call.1} parent=1 // pred_check_branch
      %50 = sbr.rel (0) target = $region29
    $region28: #{tpu_custom_call.1} parent=1 // pred_region
      _
    $region29: #{tpu_custom_call.1} parent=1 // pred_fallthru
      _
    // Predicated region
    $region30: #{tpu_custom_call.1} parent=1 // pred_check
      _
    $region31: #{tpu_custom_call.1} parent=1 // pred_check_branch
      %52 = sbr.rel (0) target = $region33
    $region32: #{tpu_custom_call.1} parent=1 // pred_region
      _
    $region33: #{tpu_custom_call.1} parent=1 // pred_fallthru
      _
    // Predicated region
    $region34: #{tpu_custom_call.1} parent=1 // pred_check
      _
    $region35: #{tpu_custom_call.1} parent=1 // pred_check_branch
      %54 = sbr.rel (0) target = $region37
    $region36: #{tpu_custom_call.1} parent=1 // pred_region
      _
    $region37: #{tpu_custom_call.1} parent=1 // pred_fallthru
      _
    // Predicated region
    $region38: #{tpu_custom_call.1} parent=1 // pred_check
      _
    $region39: #{tpu_custom_call.1} parent=1 // pred_check_branch
      %56 = sbr.rel (0) target = $region41
    $region40: #{tpu_custom_call.1} parent=1 // pred_region
      %57 = dma.done [#allocation4], 6144
    $region41: #{tpu_custom_call.1} parent=1 // pred_fallthru
      _
    // Predicated region
    $region42: #{tpu_custom_call.1} parent=1 // pred_check
      _
    $region43: #{tpu_custom_call.1} parent=1 // pred_check_branch
      %59 = sbr.rel (0) target = $region45
    $region44: #{tpu_custom_call.1} parent=1 // pred_region
      %60 = dma.done [#allocation7], 6144
    $region45: #{tpu_custom_call.1} parent=1 // pred_fallthru
      _
    %v61 = vld [vmem:[%s0] sm:$0xff]
    %v62 = vld [vmem:[%s0 + $0x8] sm:$0xff]
    %v63 = vld [vmem:[%s0 + $0x18] sm:$0xff]
    %v64 = vld [vmem:[%s0 + $0x20] sm:$0xff]
    %v65 = vld [vmem:[#allocation3] sm:$0xff]
    %v66 = vld [vmem:[#allocation3 + $0x8] sm:$0xff]
    %v67 = vld [vmem:[#allocation3 + $0x10] sm:$0xff]
    %v68 = vld [vmem:[#allocation3 + $0x18] sm:$0xff]
    %v69 = vld [vmem:[#allocation3 + $0x20] sm:$0xff]
    %v70 = vld [vmem:[#allocation3 + $0x28] sm:$0xff]
    %v71 = vld [vmem:[#allocation3 + $0x30] sm:$0xff]
    %v72 = vld [vmem:[#allocation3 + $0x38] sm:$0xff]
    %v73 = vld [vmem:[#allocation3 + $0x40] sm:$0xff]
    %v74 = vld [vmem:[#allocation3 + $0x48] sm:$0xff]
    %v75 = vld [vmem:[#allocation3 + $0x50] sm:$0xff]
    %v76 = vld [vmem:[#allocation3 + $0x58] sm:$0xff]
    %v77 = vld [vmem:[#allocation3 + $0x60] sm:$0xff]
    %v78 = vld [vmem:[#allocation3 + $0x68] sm:$0xff]
    %v79 = vld [vmem:[#allocation3 + $0x70] sm:$0xff]
    %v80 = vld [vmem:[#allocation3 + $0x78] sm:$0xff]
    %v81 = vld [vmem:[%s0 + $0x1] sm:$0xff]
    %v82 = vld [vmem:[%s0 + $0x9] sm:$0xff]
    %v83 = vld [vmem:[%s0 + $0x19] sm:$0xff]
    %v84 = vld [vmem:[%s0 + $0x21] sm:$0xff]
    %s85 = scalar_lea.vmem [#allocation3], 128
    %v86 = vld [vmem:[%s85] sm:$0xff]
    %v87 = vld [vmem:[%s85 + $0x8] sm:$0xff]
    %v88 = vld [vmem:[%s85 + $0x10] sm:$0xff]
    %v89 = vld [vmem:[%s85 + $0x18] sm:$0xff]
    %v90 = vld [vmem:[%s85 + $0x20] sm:$0xff]
    %v91 = vld [vmem:[%s85 + $0x28] sm:$0xff]
    %v92 = vld [vmem:[%s85 + $0x30] sm:$0xff]
    %v93 = vld [vmem:[%s85 + $0x38] sm:$0xff]
    %v94 = vld [vmem:[%s85 + $0x40] sm:$0xff]
    %v95 = vld [vmem:[%s85 + $0x48] sm:$0xff]
    %v96 = vld [vmem:[%s85 + $0x50] sm:$0xff]
    %v97 = vld [vmem:[%s85 + $0x58] sm:$0xff]
    %v98 = vld [vmem:[%s85 + $0x60] sm:$0xff]
    %v99 = vld [vmem:[%s85 + $0x68] sm:$0xff]
    %v100 = vld [vmem:[%s85 + $0x70] sm:$0xff]
    %v101 = vld [vmem:[%s85 + $0x78] sm:$0xff]
    %102 = vmatprep.subr.mxu0 0.0
    %103 = vmatpush1.msra.mxu0 %v101
    %104 = vmatprep.subr.mxu0 0.0
    %105 = vmatpush1.msra.mxu0 %v100
    %106 = vmatprep.subr.mxu0 0.0
    %107 = vmatpush1.msra.mxu0 %v99
    %108 = vmatprep.subr.mxu0 0.0
    %109 = vmatpush1.msra.mxu0 %v98
    %110 = vmatprep.subr.mxu0 0.0
    %111 = vmatpush1.msra.mxu0 %v97
    %112 = vmatprep.subr.mxu0 0.0
    %113 = vmatpush1.msra.mxu0 %v96
    %114 = vmatprep.subr.mxu0 0.0
    %115 = vmatpush1.msra.mxu0 %v95
    %116 = vmatprep.subr.mxu0 0.0
    %117 = vmatpush1.msra.mxu0 %v94
    %118 = vmatprep.subr.mxu0 0.0
    %119 = vmatpush1.msra.mxu0 %v93
    %120 = vmatprep.subr.mxu0 0.0
    %121 = vmatpush1.msra.mxu0 %v92
    %122 = vmatprep.subr.mxu0 0.0
    %123 = vmatpush1.msra.mxu0 %v91
    %124 = vmatprep.subr.mxu0 0.0
    %125 = vmatpush1.msra.mxu0 %v90
    %126 = vmatprep.subr.mxu0 0.0
    %127 = vmatpush1.msra.mxu0 %v89
    %128 = vmatprep.subr.mxu0 0.0
    %129 = vmatpush1.msra.mxu0 %v88
    %130 = vmatprep.subr.mxu0 0.0
    %131 = vmatpush1.msra.mxu0 %v87
    %132 = vmatprep.subr.mxu0 0.0
    %133 = vmatpush1.msra.mxu0 %v86
    %134 = vmatprep.subr.mxu0 0.0
    %135 = vmatpush2.msra.mxu0 0.0
    %136 = vmatprep.subr.mxu0 0.0
    %137 = vmatpush2.msra.mxu0 0.0
    %138 = vmatprep.subr.mxu0 0.0
    %139 = vmatpush2.msra.mxu0 0.0
    %140 = vmatprep.subr.mxu0 0.0
    %141 = vmatpush2.msra.mxu0 0.0
    %142 = vmatprep.subr.mxu0 0.0
    %143 = vmatpush2.msra.mxu0 0.0
    %144 = vmatprep.subr.mxu0 0.0
    %145 = vmatpush2.msra.mxu0 0.0
    %146 = vmatprep.subr.mxu0 0.0
    %147 = vmatpush2.msra.mxu0 0.0
    %148 = vmatprep.subr.mxu0 0.0
    %149 = vmatpush2.msra.mxu0 0.0
    %150 = vmatprep.subr.mxu0 0.0
    %151 = vmatpush2.msra.mxu0 0.0
    %152 = vmatprep.subr.mxu0 0.0
    %153 = vmatpush2.msra.mxu0 0.0
    %154 = vmatprep.subr.mxu0 0.0
    %155 = vmatpush2.msra.mxu0 0.0
    %156 = vmatprep.subr.mxu0 0.0
    %157 = vmatpush2.msra.mxu0 0.0
    %158 = vmatprep.subr.mxu0 0.0
    %159 = vmatpush2.msra.mxu0 0.0
    %160 = vmatprep.subr.mxu0 0.0
    %161 = vmatpush2.msra.mxu0 0.0
    %162 = vmatprep.subr.mxu0 0.0
    %163 = vmatpush2.msra.mxu0 0.0
    %164 = vmatprep.subr.mxu0 0.0
    %165 = vmatpush2.msra.mxu0 0.0
    %166 = vmatprep.mubr.f32.mxu0 0.0
    %167 = vmatmul.mubr.f32.gmra.mxu0 %v81
    %v168 = vpop.f32.mrf.mxu0
    %v169 = vadd.f32 0.0, %v168
    %v170 = vpop.f32.mrf.mxu0
    %171 = vmatprep.mubr.f32.mxu0 0.0
    %172 = vmatmul.mubr.f32.gmra.mxu0 %v82
    %v173 = vpop.f32.mrf.mxu0
    %v174 = vadd.f32 0.0, %v173
    %v175 = vpop.f32.mrf.mxu0
    %176 = vmatprep.mubr.f32.mxu0 0.0
    %177 = vmatmul.mubr.f32.gmra.mxu0 %v83
    %v178 = vpop.f32.mrf.mxu0
    %v179 = vadd.f32 0.0, %v178
    %v180 = vpop.f32.mrf.mxu0
    %181 = vmatprep.mubr.f32.mxu0 0.0
    %182 = vmatmul.mubr.f32.gmra.mxu0 %v84
    %v183 = vpop.f32.mrf.mxu0
    %v184 = vadd.f32 0.0, %v183
    %v185 = vpop.f32.mrf.mxu0
    %186 = vdwg.mxu0
    %187 = vmatprep.subr.mxu0 0.0
    %188 = vmatpush1.msra.mxu0 %v80
    %189 = vmatprep.subr.mxu0 0.0
    %190 = vmatpush1.msra.mxu0 %v79
    %191 = vmatprep.subr.mxu0 0.0
    %192 = vmatpush1.msra.mxu0 %v78
    %193 = vmatprep.subr.mxu0 0.0
    %194 = vmatpush1.msra.mxu0 %v77
    %195 = vmatprep.subr.mxu0 0.0
    %196 = vmatpush1.msra.mxu0 %v76
    %197 = vmatprep.subr.mxu0 0.0
    %198 = vmatpush1.msra.mxu0 %v75
    %199 = vmatprep.subr.mxu0 0.0
    %200 = vmatpush1.msra.mxu0 %v74
    %201 = vmatprep.subr.mxu0 0.0
    %202 = vmatpush1.msra.mxu0 %v73
    %203 = vmatprep.subr.mxu0 0.0
    %204 = vmatpush1.msra.mxu0 %v72
    %205 = vmatprep.subr.mxu0 0.0
    %206 = vmatpush1.msra.mxu0 %v71
    %207 = vmatprep.subr.mxu0 0.0
    %208 = vmatpush1.msra.mxu0 %v70
    %209 = vmatprep.subr.mxu0 0.0
    %210 = vmatpush1.msra.mxu0 %v69
    %211 = vmatprep.subr.mxu0 0.0
    %212 = vmatpush1.msra.mxu0 %v68
    %213 = vmatprep.subr.mxu0 0.0
    %214 = vmatpush1.msra.mxu0 %v67
    %215 = vmatprep.subr.mxu0 0.0
    %216 = vmatpush1.msra.mxu0 %v66
    %217 = vmatprep.subr.mxu0 0.0
    %218 = vmatpush1.msra.mxu0 %v65
    %219 = vmatprep.subr.mxu0 0.0
    %220 = vmatpush2.msra.mxu0 0.0
    %221 = vmatprep.subr.mxu0 0.0
    %222 = vmatpush2.msra.mxu0 0.0
    %223 = vmatprep.subr.mxu0 0.0
    %224 = vmatpush2.msra.mxu0 0.0
    %225 = vmatprep.subr.mxu0 0.0
    %226 = vmatpush2.msra.mxu0 0.0
    %227 = vmatprep.subr.mxu0 0.0
    %228 = vmatpush2.msra.mxu0 0.0
    %229 = vmatprep.subr.mxu0 0.0
    %230 = vmatpush2.msra.mxu0 0.0
    %231 = vmatprep.subr.mxu0 0.0
    %232 = vmatpush2.msra.mxu0 0.0
    %233 = vmatprep.subr.mxu0 0.0
    %234 = vmatpush2.msra.mxu0 0.0
    %235 = vmatprep.subr.mxu0 0.0
    %236 = vmatpush2.msra.mxu0 0.0
    %237 = vmatprep.subr.mxu0 0.0
    %238 = vmatpush2.msra.mxu0 0.0
    %239 = vmatprep.subr.mxu0 0.0
    %240 = vmatpush2.msra.mxu0 0.0
    %241 = vmatprep.subr.mxu0 0.0
    %242 = vmatpush2.msra.mxu0 0.0
    %243 = vmatprep.subr.mxu0 0.0
    %244 = vmatpush2.msra.mxu0 0.0
    %245 = vmatprep.subr.mxu0 0.0
    %246 = vmatpush2.msra.mxu0 0.0
    %247 = vmatprep.subr.mxu0 0.0
    %248 = vmatpush2.msra.mxu0 0.0
    %249 = vmatprep.subr.mxu0 0.0
    %250 = vmatpush2.msra.mxu0 0.0
    %251 = vmatprep.mubr.f32.mxu0 0.0
    %252 = vmatmul.mubr.f32.gmra.mxu0 %v61
    %v253 = vpop.f32.mrf.mxu0
    %v254 = vadd.f32 %v169, %v253
    %v255 = vpop.f32.mrf.mxu0
    %256 = vmatprep.mubr.f32.mxu0 0.0
    %257 = vmatmul.mubr.f32.gmra.mxu0 %v62
    %v258 = vpop.f32.mrf.mxu0
    %v259 = vadd.f32 %v174, %v258
    %v260 = vpop.f32.mrf.mxu0
    %261 = vmatprep.mubr.f32.mxu0 0.0
    %262 = vmatmul.mubr.f32.gmra.mxu0 %v63
    %v263 = vpop.f32.mrf.mxu0
    %v264 = vadd.f32 %v179, %v263
    %v265 = vpop.f32.mrf.mxu0
    %266 = vmatprep.mubr.f32.mxu0 0.0
    %267 = vmatmul.mubr.f32.gmra.mxu0 %v64
    %v268 = vpop.f32.mrf.mxu0
    %v269 = vadd.f32 %v184, %v268
    %v270 = vpop.f32.mrf.mxu0
    %271 = vdwg.mxu0
    %v272 = vld [vmem:[%s0 + $0x2] sm:$0xff]
    %v273 = vld [vmem:[%s0 + $0xa] sm:$0xff]
    %v274 = vld [vmem:[%s0 + $0x1a] sm:$0xff]
    %v275 = vld [vmem:[%s0 + $0x22] sm:$0xff]
    %s276 = scalar_lea.vmem [#allocation3], 256
    %v277 = vld [vmem:[%s276] sm:$0xff]
    %v278 = vld [vmem:[%s276 + $0x8] sm:$0xff]
    %v279 = vld [vmem:[%s276 + $0x10] sm:$0xff]
    %v280 = vld [vmem:[%s276 + $0x18] sm:$0xff]
    %v281 = vld [vmem:[%s276 + $0x20] sm:$0xff]
    %v282 = vld [vmem:[%s276 + $0x28] sm:$0xff]
    %v283 = vld [vmem:[%s276 + $0x30] sm:$0xff]
    %v284 = vld [vmem:[%s276 + $0x38] sm:$0xff]
    %v285 = vld [vmem:[%s276 + $0x40] sm:$0xff]
    %v286 = vld [vmem:[%s276 + $0x48] sm:$0xff]
    %v287 = vld [vmem:[%s276 + $0x50] sm:$0xff]
    %v288 = vld [vmem:[%s276 + $0x58] sm:$0xff]
    %v289 = vld [vmem:[%s276 + $0x60] sm:$0xff]
    %v290 = vld [vmem:[%s276 + $0x68] sm:$0xff]
    %v291 = vld [vmem:[%s276 + $0x70] sm:$0xff]
    %v292 = vld [vmem:[%s276 + $0x78] sm:$0xff]
    %293 = vmatprep.subr.mxu0 0.0
    %294 = vmatpush1.msra.mxu0 %v292
    %295 = vmatprep.subr.mxu0 0.0
    %296 = vmatpush1.msra.mxu0 %v291
    %297 = vmatprep.subr.mxu0 0.0
    %298 = vmatpush1.msra.mxu0 %v290
    %299 = vmatprep.subr.mxu0 0.0
    %300 = vmatpush1.msra.mxu0 %v289
    %301 = vmatprep.subr.mxu0 0.0
    %302 = vmatpush1.msra.mxu0 %v288
    %303 = vmatprep.subr.mxu0 0.0
    %304 = vmatpush1.msra.mxu0 %v287
    %305 = vmatprep.subr.mxu0 0.0
    %306 = vmatpush1.msra.mxu0 %v286
    %307 = vmatprep.subr.mxu0 0.0
    %308 = vmatpush1.msra.mxu0 %v285
    %309 = vmatprep.subr.mxu0 0.0
    %310 = vmatpush1.msra.mxu0 %v284
    %311 = vmatprep.subr.mxu0 0.0
    %312 = vmatpush1.msra.mxu0 %v283
    %313 = vmatprep.subr.mxu0 0.0
    %314 = vmatpush1.msra.mxu0 %v282
    %315 = vmatprep.subr.mxu0 0.0
    %316 = vmatpush1.msra.mxu0 %v281
    %317 = vmatprep.subr.mxu0 0.0
    %318 = vmatpush1.msra.mxu0 %v280
    %319 = vmatprep.subr.mxu0 0.0
    %320 = vmatpush1.msra.mxu0 %v279
    %321 = vmatprep.subr.mxu0 0.0
    %322 = vmatpush1.msra.mxu0 %v278
    %323 = vmatprep.subr.mxu0 0.0
    %324 = vmatpush1.msra.mxu0 %v277
    %325 = vmatprep.subr.mxu0 0.0
    %326 = vmatpush2.msra.mxu0 0.0
    %327 = vmatprep.subr.mxu0 0.0
    %328 = vmatpush2.msra.mxu0 0.0
    %329 = vmatprep.subr.mxu0 0.0
    %330 = vmatpush2.msra.mxu0 0.0
    %331 = vmatprep.subr.mxu0 0.0
    %332 = vmatpush2.msra.mxu0 0.0
    %333 = vmatprep.subr.mxu0 0.0
    %334 = vmatpush2.msra.mxu0 0.0
    %335 = vmatprep.subr.mxu0 0.0
    %336 = vmatpush2.msra.mxu0 0.0
    %337 = vmatprep.subr.mxu0 0.0
    %338 = vmatpush2.msra.mxu0 0.0
    %339 = vmatprep.subr.mxu0 0.0
    %340 = vmatpush2.msra.mxu0 0.0
    %341 = vmatprep.subr.mxu0 0.0
    %342 = vmatpush2.msra.mxu0 0.0
    %343 = vmatprep.subr.mxu0 0.0
    %344 = vmatpush2.msra.mxu0 0.0
    %345 = vmatprep.subr.mxu0 0.0
    %346 = vmatpush2.msra.mxu0 0.0
    %347 = vmatprep.subr.mxu0 0.0
    %348 = vmatpush2.msra.mxu0 0.0
    %349 = vmatprep.subr.mxu0 0.0
    %350 = vmatpush2.msra.mxu0 0.0
    %351 = vmatprep.subr.mxu0 0.0
    %352 = vmatpush2.msra.mxu0 0.0
    %353 = vmatprep.subr.mxu0 0.0
    %354 = vmatpush2.msra.mxu0 0.0
    %355 = vmatprep.subr.mxu0 0.0
    %356 = vmatpush2.msra.mxu0 0.0
    %357 = vmatprep.mubr.f32.mxu0 0.0
    %358 = vmatmul.mubr.f32.gmra.mxu0 %v272
    %v359 = vpop.f32.mrf.mxu0
    %v360 = vadd.f32 0.0, %v359
    %v361 = vpop.f32.mrf.mxu0
    %362 = vmatprep.mubr.f32.mxu0 0.0
    %363 = vmatmul.mubr.f32.gmra.mxu0 %v273
    %v364 = vpop.f32.mrf.mxu0
    %v365 = vadd.f32 0.0, %v364
    %v366 = vpop.f32.mrf.mxu0
    %367 = vmatprep.mubr.f32.mxu0 0.0
    %368 = vmatmul.mubr.f32.gmra.mxu0 %v274
    %v369 = vpop.f32.mrf.mxu0
    %v370 = vadd.f32 0.0, %v369
    %v371 = vpop.f32.mrf.mxu0
    %372 = vmatprep.mubr.f32.mxu0 0.0
    %373 = vmatmul.mubr.f32.gmra.mxu0 %v275
    %v374 = vpop.f32.mrf.mxu0
    %v375 = vadd.f32 0.0, %v374
    %v376 = vpop.f32.mrf.mxu0
    %377 = vdwg.mxu0
    %v378 = vadd.f32 %v254, %v360
    %v379 = vadd.f32 %v259, %v365
    %v380 = vadd.f32 %v264, %v370
    %v381 = vadd.f32 %v269, %v375
    %v382 = vadd.f32 %v378, %v379
    %v383 = vadd.f32 %v382, %v380
    %v384 = vadd.f32 %v383, %v381
    %v385 = vrot.slane %v384, 4
    %v386 = vadd.f32 %v384, %v385
    %v387 = vrot.slane %v386, 2
    %v388 = vadd.f32 %v386, %v387
    %v389 = vrot.slane %v388, 1
    %v390 = vadd.f32 %v388, %v389
    %v391 = vmul.f32 %v378, %v378
    %v392 = vmul.f32 %v379, %v379
    %v393 = vmul.f32 %v380, %v380
    %v394 = vmul.f32 %v381, %v381
    %v395 = vadd.f32 %v391, %v392
    %v396 = vadd.f32 %v395, %v393
    %v397 = vadd.f32 %v396, %v394
    %v398 = vrot.slane %v397, 4
    %v399 = vadd.f32 %v397, %v398
    %v400 = vrot.slane %v399, 2
    %v401 = vadd.f32 %v399, %v400
    %v402 = vrot.slane %v401, 1
    %v403 = vadd.f32 %v401, %v402
    %v404 = vld [vmem:[%s3] sm:$0xff]
    %v405 = vld [vmem:[%s3 + $0x8] sm:$0xff]
    %v406 = vld [vmem:[%s3 + $0x10] sm:$0xff]
    %v407 = vld [vmem:[%s3 + $0x18] sm:$0xff]
    %v408 = vld [vmem:[%s3 + $0x20] sm:$0xff]
    %v409 = vld [vmem:[%s3 + $0x28] sm:$0xff]
    %v410 = vld [vmem:[%s3 + $0x30] sm:$0xff]
    %v411 = vld [vmem:[%s3 + $0x38] sm:$0xff]
    %v412 = vld [vmem:[%s3 + $0x40] sm:$0xff]
    %v413 = vld [vmem:[%s3 + $0x48] sm:$0xff]
    %v414 = vld [vmem:[%s3 + $0x50] sm:$0xff]
    %v415 = vld [vmem:[%s3 + $0x58] sm:$0xff]
    %v416 = vld [vmem:[%s3 + $0x60] sm:$0xff]
    %v417 = vld [vmem:[%s3 + $0x68] sm:$0xff]
    %v418 = vld [vmem:[%s3 + $0x70] sm:$0xff]
    %v419 = vld [vmem:[%s3 + $0x78] sm:$0xff]
    %420 = vmatprep.subr.mxu0 0.0
    %421 = vmatpush1.msra.mxu0 %v419
    %422 = vmatprep.subr.mxu0 0.0
    %423 = vmatpush1.msra.mxu0 %v418
    %424 = vmatprep.subr.mxu0 0.0
    %425 = vmatpush1.msra.mxu0 %v417
    %426 = vmatprep.subr.mxu0 0.0
    %427 = vmatpush1.msra.mxu0 %v416
    %428 = vmatprep.subr.mxu0 0.0
    %429 = vmatpush1.msra.mxu0 %v415
    %430 = vmatprep.subr.mxu0 0.0
    %431 = vmatpush1.msra.mxu0 %v414
    %432 = vmatprep.subr.mxu0 0.0
    %433 = vmatpush1.msra.mxu0 %v413
    %434 = vmatprep.subr.mxu0 0.0
    %435 = vmatpush1.msra.mxu0 %v412
    %436 = vmatprep.subr.mxu0 0.0
    %437 = vmatpush1.msra.mxu0 %v411
    %438 = vmatprep.subr.mxu0 0.0
    %439 = vmatpush1.msra.mxu0 %v410
    %440 = vmatprep.subr.mxu0 0.0
    %441 = vmatpush1.msra.mxu0 %v409
    %442 = vmatprep.subr.mxu0 0.0
    %443 = vmatpush1.msra.mxu0 %v408
    %444 = vmatprep.subr.mxu0 0.0
    %445 = vmatpush1.msra.mxu0 %v407
    %446 = vmatprep.subr.mxu0 0.0
    %447 = vmatpush1.msra.mxu0 %v406
    %448 = vmatprep.subr.mxu0 0.0
    %449 = vmatpush1.msra.mxu0 %v405
    %450 = vmatprep.subr.mxu0 0.0
    %451 = vmatpush1.msra.mxu0 %v404
    %452 = vmatprep.subr.mxu0 0.0
    %453 = vmatpush2.msra.mxu0 0.0
    %454 = vmatprep.subr.mxu0 0.0
    %455 = vmatpush2.msra.mxu0 0.0
    %456 = vmatprep.subr.mxu0 0.0
    %457 = vmatpush2.msra.mxu0 0.0
    %458 = vmatprep.subr.mxu0 0.0
    %459 = vmatpush2.msra.mxu0 0.0
    %460 = vmatprep.subr.mxu0 0.0
    %461 = vmatpush2.msra.mxu0 0.0
    %462 = vmatprep.subr.mxu0 0.0
    %463 = vmatpush2.msra.mxu0 0.0
    %464 = vmatprep.subr.mxu0 0.0
    %465 = vmatpush2.msra.mxu0 0.0
    %466 = vmatprep.subr.mxu0 0.0
    %467 = vmatpush2.msra.mxu0 0.0
    %468 = vmatprep.subr.mxu0 0.0
    %469 = vmatpush2.msra.mxu0 0.0
    %470 = vmatprep.subr.mxu0 0.0
    %471 = vmatpush2.msra.mxu0 0.0
    %472 = vmatprep.subr.mxu0 0.0
    %473 = vmatpush2.msra.mxu0 0.0
    %474 = vmatprep.subr.mxu0 0.0
    %475 = vmatpush2.msra.mxu0 0.0
    %476 = vmatprep.subr.mxu0 0.0
    %477 = vmatpush2.msra.mxu0 0.0
    %478 = vmatprep.subr.mxu0 0.0
    %479 = vmatpush2.msra.mxu0 0.0
    %480 = vmatprep.subr.mxu0 0.0
    %481 = vmatpush2.msra.mxu0 0.0
    %482 = vmatprep.subr.mxu0 0.0
    %483 = vmatpush2.msra.mxu0 0.0
    %484 = vmatprep.mubr.f32.mxu0 0.0
    %485 = vmatmul.mubr.f32.gmra.mxu0 %v390
    %v486 = vpop.f32.mrf.mxu0
    %v487 = vadd.f32 0.0, %v486
    %v488 = vpop.f32.mrf.mxu0
    %489 = vdwg.mxu0
    %v490 = vmul.f32 %v487, 0.001953125
    %491 = vmatprep.subr.mxu0 0.0
    %492 = vmatpush1.msra.mxu0 %v419
    %493 = vmatprep.subr.mxu0 0.0
    %494 = vmatpush1.msra.mxu0 %v418
    %495 = vmatprep.subr.mxu0 0.0
    %496 = vmatpush1.msra.mxu0 %v417
    %497 = vmatprep.subr.mxu0 0.0
    %498 = vmatpush1.msra.mxu0 %v416
    %499 = vmatprep.subr.mxu0 0.0
    %500 = vmatpush1.msra.mxu0 %v415
    %501 = vmatprep.subr.mxu0 0.0
    %502 = vmatpush1.msra.mxu0 %v414
    %503 = vmatprep.subr.mxu0 0.0
    %504 = vmatpush1.msra.mxu0 %v413
    %505 = vmatprep.subr.mxu0 0.0
    %506 = vmatpush1.msra.mxu0 %v412
    %507 = vmatprep.subr.mxu0 0.0
    %508 = vmatpush1.msra.mxu0 %v411
    %509 = vmatprep.subr.mxu0 0.0
    %510 = vmatpush1.msra.mxu0 %v410
    %511 = vmatprep.subr.mxu0 0.0
    %512 = vmatpush1.msra.mxu0 %v409
    %513 = vmatprep.subr.mxu0 0.0
    %514 = vmatpush1.msra.mxu0 %v408
    %515 = vmatprep.subr.mxu0 0.0
    %516 = vmatpush1.msra.mxu0 %v407
    %517 = vmatprep.subr.mxu0 0.0
    %518 = vmatpush1.msra.mxu0 %v406
    %519 = vmatprep.subr.mxu0 0.0
    %520 = vmatpush1.msra.mxu0 %v405
    %521 = vmatprep.subr.mxu0 0.0
    %522 = vmatpush1.msra.mxu0 %v404
    %523 = vmatprep.subr.mxu0 0.0
    %524 = vmatpush2.msra.mxu0 0.0
    %525 = vmatprep.subr.mxu0 0.0
    %526 = vmatpush2.msra.mxu0 0.0
    %527 = vmatprep.subr.mxu0 0.0
    %528 = vmatpush2.msra.mxu0 0.0
    %529 = vmatprep.subr.mxu0 0.0
    %530 = vmatpush2.msra.mxu0 0.0
    %531 = vmatprep.subr.mxu0 0.0
    %532 = vmatpush2.msra.mxu0 0.0
    %533 = vmatprep.subr.mxu0 0.0
    %534 = vmatpush2.msra.mxu0 0.0
    %535 = vmatprep.subr.mxu0 0.0
    %536 = vmatpush2.msra.mxu0 0.0
    %537 = vmatprep.subr.mxu0 0.0
    %538 = vmatpush2.msra.mxu0 0.0
    %539 = vmatprep.subr.mxu0 0.0
    %540 = vmatpush2.msra.mxu0 0.0
    %541 = vmatprep.subr.mxu0 0.0
    %542 = vmatpush2.msra.mxu0 0.0
    %543 = vmatprep.subr.mxu0 0.0
    %544 = vmatpush2.msra.mxu0 0.0
    %545 = vmatprep.subr.mxu0 0.0
    %546 = vmatpush2.msra.mxu0 0.0
    %547 = vmatprep.subr.mxu0 0.0
    %548 = vmatpush2.msra.mxu0 0.0
    %549 = vmatprep.subr.mxu0 0.0
    %550 = vmatpush2.msra.mxu0 0.0
    %551 = vmatprep.subr.mxu0 0.0
    %552 = vmatpush2.msra.mxu0 0.0
    %553 = vmatprep.subr.mxu0 0.0
    %554 = vmatpush2.msra.mxu0 0.0
    %555 = vmatprep.mubr.f32.mxu0 0.0
    %556 = vmatmul.mubr.f32.gmra.mxu0 %v403
    %v557 = vpop.f32.mrf.mxu0
    %v558 = vadd.f32 0.0, %v557
    %v559 = vpop.f32.mrf.mxu0
    %560 = vdwg.mxu0
    %v561 = vmul.f32 %v558, 0.001953125
    %v562 = vmul.f32 %v490, %v490
    %v563 = vsub.f32 %v561, %v562
    %v564 = vld [vmem:[%s5] sm:$0x1]
    %v565 = vadd.f32 %v563, 1e-05
    %v566 = vrsqrt.pop %v565
    %v567 = vmul.f32 %v564, %v566
    %v568 = vld [vmem:[%s6] sm:$0x1]
    %v569 = vmul.f32 %v490, %v567
    %v570 = vsub.f32 %v568, %v569
    %v571 = vld [vmem:[%s4] sm:$0xff]
    %vm572 = vcmask 64512
    %v574 = vsel %vm572, %v567, 0
    %576 = vmatprep.subr.mxu0 0.0
    %577 = vmatpush1.msra.mxu0 0.0
    %578 = vmatprep.subr.mxu0 0.0
    %579 = vmatpush1.msra.mxu0 0.0
    %580 = vmatprep.subr.mxu0 0.0
    %581 = vmatpush1.msra.mxu0 0.0
    %582 = vmatprep.subr.mxu0 0.0
    %583 = vmatpush1.msra.mxu0 0.0
    %584 = vmatprep.subr.mxu0 0.0
    %585 = vmatpush1.msra.mxu0 0.0
    %586 = vmatprep.subr.mxu0 0.0
    %587 = vmatpush1.msra.mxu0 0.0
    %588 = vmatprep.subr.mxu0 0.0
    %589 = vmatpush1.msra.mxu0 0.0
    %590 = vmatprep.subr.mxu0 0.0
    %591 = vmatpush1.msra.mxu0 0.0
    %592 = vmatprep.subr.mxu0 0.0
    %593 = vmatpush1.msra.mxu0 0.0
    %594 = vmatprep.subr.mxu0 0.0
    %595 = vmatpush1.msra.mxu0 0.0
    %596 = vmatprep.subr.mxu0 0.0
    %597 = vmatpush1.msra.mxu0 0.0
    %598 = vmatprep.subr.mxu0 0.0
    %599 = vmatpush1.msra.mxu0 0.0
    %600 = vmatprep.subr.mxu0 0.0
    %601 = vmatpush1.msra.mxu0 0.0
    %602 = vmatprep.subr.mxu0 0.0
    %603 = vmatpush1.msra.mxu0 0.0
    %604 = vmatprep.subr.mxu0 0.0
    %605 = vmatpush1.msra.mxu0 0.0
    %606 = vmatprep.subr.mxu0 0.0
    %607 = vmatpush1.msra.mxu0 %v571
    %608 = vmatprep.subr.mxu0 0.0
    %609 = vmatpush2.msra.mxu0 0.0
    %610 = vmatprep.subr.mxu0 0.0
    %611 = vmatpush2.msra.mxu0 0.0
    %612 = vmatprep.subr.mxu0 0.0
    %613 = vmatpush2.msra.mxu0 0.0
    %614 = vmatprep.subr.mxu0 0.0
    %615 = vmatpush2.msra.mxu0 0.0
    %616 = vmatprep.subr.mxu0 0.0
    %617 = vmatpush2.msra.mxu0 0.0
    %618 = vmatprep.subr.mxu0 0.0
    %619 = vmatpush2.msra.mxu0 0.0
    %620 = vmatprep.subr.mxu0 0.0
    %621 = vmatpush2.msra.mxu0 0.0
    %622 = vmatprep.subr.mxu0 0.0
    %623 = vmatpush2.msra.mxu0 0.0
    %624 = vmatprep.subr.mxu0 0.0
    %625 = vmatpush2.msra.mxu0 0.0
    %626 = vmatprep.subr.mxu0 0.0
    %627 = vmatpush2.msra.mxu0 0.0
    %628 = vmatprep.subr.mxu0 0.0
    %629 = vmatpush2.msra.mxu0 0.0
    %630 = vmatprep.subr.mxu0 0.0
    %631 = vmatpush2.msra.mxu0 0.0
    %632 = vmatprep.subr.mxu0 0.0
    %633 = vmatpush2.msra.mxu0 0.0
    %634 = vmatprep.subr.mxu0 0.0
    %635 = vmatpush2.msra.mxu0 0.0
    %636 = vmatprep.subr.mxu0 0.0
    %637 = vmatpush2.msra.mxu0 0.0
    %638 = vmatprep.subr.mxu0 0.0
    %639 = vmatpush2.msra.mxu0 0.0
    %640 = vmatprep.mubr.f32.mxu0 0.0
    %641 = vmatmul.mubr.f32.gmra.mxu0 %v574
    %v642 = vpop.f32.mrf.mxu0
    %v643 = vadd.f32 0.0, %v642
    %v644 = vpop.f32.mrf.mxu0
    %645 = vdwg.mxu0
    %v647 = vsel %vm572, %v570, 0
    %649 = vmatprep.subr.mxu0 0.0
    %650 = vmatpush1.msra.mxu0 0.0
    %651 = vmatprep.subr.mxu0 0.0
    %652 = vmatpush1.msra.mxu0 0.0
    %653 = vmatprep.subr.mxu0 0.0
    %654 = vmatpush1.msra.mxu0 0.0
    %655 = vmatprep.subr.mxu0 0.0
    %656 = vmatpush1.msra.mxu0 0.0
    %657 = vmatprep.subr.mxu0 0.0
    %658 = vmatpush1.msra.mxu0 0.0
    %659 = vmatprep.subr.mxu0 0.0
    %660 = vmatpush1.msra.mxu0 0.0
    %661 = vmatprep.subr.mxu0 0.0
    %662 = vmatpush1.msra.mxu0 0.0
    %663 = vmatprep.subr.mxu0 0.0
    %664 = vmatpush1.msra.mxu0 0.0
    %665 = vmatprep.subr.mxu0 0.0
    %666 = vmatpush1.msra.mxu0 0.0
    %667 = vmatprep.subr.mxu0 0.0
    %668 = vmatpush1.msra.mxu0 0.0
    %669 = vmatprep.subr.mxu0 0.0
    %670 = vmatpush1.msra.mxu0 0.0
    %671 = vmatprep.subr.mxu0 0.0
    %672 = vmatpush1.msra.mxu0 0.0
    %673 = vmatprep.subr.mxu0 0.0
    %674 = vmatpush1.msra.mxu0 0.0
    %675 = vmatprep.subr.mxu0 0.0
    %676 = vmatpush1.msra.mxu0 0.0
    %677 = vmatprep.subr.mxu0 0.0
    %678 = vmatpush1.msra.mxu0 0.0
    %679 = vmatprep.subr.mxu0 0.0
    %680 = vmatpush1.msra.mxu0 %v571
    %681 = vmatprep.subr.mxu0 0.0
    %682 = vmatpush2.msra.mxu0 0.0
    %683 = vmatprep.subr.mxu0 0.0
    %684 = vmatpush2.msra.mxu0 0.0
    %685 = vmatprep.subr.mxu0 0.0
    %686 = vmatpush2.msra.mxu0 0.0
    %687 = vmatprep.subr.mxu0 0.0
    %688 = vmatpush2.msra.mxu0 0.0
    %689 = vmatprep.subr.mxu0 0.0
    %690 = vmatpush2.msra.mxu0 0.0
    %691 = vmatprep.subr.mxu0 0.0
    %692 = vmatpush2.msra.mxu0 0.0
    %693 = vmatprep.subr.mxu0 0.0
    %694 = vmatpush2.msra.mxu0 0.0
    %695 = vmatprep.subr.mxu0 0.0
    %696 = vmatpush2.msra.mxu0 0.0
    %697 = vmatprep.subr.mxu0 0.0
    %698 = vmatpush2.msra.mxu0 0.0
    %699 = vmatprep.subr.mxu0 0.0
    %700 = vmatpush2.msra.mxu0 0.0
    %701 = vmatprep.subr.mxu0 0.0
    %702 = vmatpush2.msra.mxu0 0.0
    %703 = vmatprep.subr.mxu0 0.0
    %704 = vmatpush2.msra.mxu0 0.0
    %705 = vmatprep.subr.mxu0 0.0
    %706 = vmatpush2.msra.mxu0 0.0
    %707 = vmatprep.subr.mxu0 0.0
    %708 = vmatpush2.msra.mxu0 0.0
    %709 = vmatprep.subr.mxu0 0.0
    %710 = vmatpush2.msra.mxu0 0.0
    %711 = vmatprep.subr.mxu0 0.0
    %712 = vmatpush2.msra.mxu0 0.0
    %713 = vmatprep.mubr.f32.mxu0 0.0
    %714 = vmatmul.mubr.f32.gmra.mxu0 %v647
    %v715 = vpop.f32.mrf.mxu0
    %v716 = vadd.f32 0.0, %v715
    %v717 = vpop.f32.mrf.mxu0
    %718 = vdwg.mxu0
    %v719 = vlaneseq
    %v720 = vshrl.u32 %v719, 7
    %v721 = vsub.s32 0, %v720
    %v722 = vrot.slane %v643, %v721
    %v723 = vmul.f32 %v378, %v722
    %v724 = vmul.f32 %v379, %v722
    %v725 = vmul.f32 %v380, %v722
    %v726 = vmul.f32 %v381, %v722
    %v727 = vlaneseq
    %v728 = vshrl.u32 %v727, 7
    %v729 = vsub.s32 0, %v728
    %v730 = vrot.slane %v716, %v729
    %v731 = vadd.f32 %v723, %v730
    %v732 = vadd.f32 %v724, %v730
    %v733 = vadd.f32 %v725, %v730
    %v734 = vadd.f32 %v726, %v730
    %v735 = vmax.f32 %v731, 0.0
    %v736 = vmax.f32 %v732, 0.0
    %v737 = vmax.f32 %v733, 0.0
    %v738 = vmax.f32 %v734, 0.0
    %739 = vst [vmem:[#allocation2] sm:$0x1] 0.0
    %740 = vst [vmem:[#allocation2 + $0x18] sm:$0x1] 0.0
    %741 = vst [vmem:[#allocation2 + $0x11] sm:$0x1] 0.0
    %742 = vst [vmem:[#allocation2 + $0x29] sm:$0x1] 0.0
    %743 = vst [vmem:[#allocation2 + $0x1] sm:$0xff] %v735
    %744 = vst [vmem:[#allocation2 + $0x9] sm:$0xff] %v736
    %745 = vst [vmem:[#allocation2 + $0x19] sm:$0xff] %v737
    %746 = vst [vmem:[#allocation2 + $0x21] sm:$0xff] %v738
    %v747 = vld [vmem:[#allocation2] sm:$0xff]
    %v748 = vld [vmem:[#allocation2 + $0x8] sm:$0xff]
    %v749 = vld [vmem:[#allocation2 + $0x18] sm:$0xff]
    %v750 = vld [vmem:[#allocation2 + $0x20] sm:$0xff]
    %v751 = vld [vmem:[#allocation6] sm:$0xff]
    %v752 = vld [vmem:[#allocation6 + $0x8] sm:$0xff]
    %v753 = vld [vmem:[#allocation6 + $0x10] sm:$0xff]
    %v754 = vld [vmem:[#allocation6 + $0x18] sm:$0xff]
    %v755 = vld [vmem:[#allocation6 + $0x20] sm:$0xff]
    %v756 = vld [vmem:[#allocation6 + $0x28] sm:$0xff]
    %v757 = vld [vmem:[#allocation6 + $0x30] sm:$0xff]
    %v758 = vld [vmem:[#allocation6 + $0x38] sm:$0xff]
    %v759 = vld [vmem:[#allocation6 + $0x40] sm:$0xff]
    %v760 = vld [vmem:[#allocation6 + $0x48] sm:$0xff]
    %v761 = vld [vmem:[#allocation6 + $0x50] sm:$0xff]
    %v762 = vld [vmem:[#allocation6 + $0x58] sm:$0xff]
    %v763 = vld [vmem:[#allocation6 + $0x60] sm:$0xff]
    %v764 = vld [vmem:[#allocation6 + $0x68] sm:$0xff]
    %v765 = vld [vmem:[#allocation6 + $0x70] sm:$0xff]
    %v766 = vld [vmem:[#allocation6 + $0x78] sm:$0xff]
    %v767 = vld [vmem:[#allocation2 + $0x1] sm:$0xff]
    %v768 = vld [vmem:[#allocation2 + $0x9] sm:$0xff]
    %v769 = vld [vmem:[#allocation2 + $0x19] sm:$0xff]
    %v770 = vld [vmem:[#allocation2 + $0x21] sm:$0xff]
    %s771 = scalar_lea.vmem [#allocation6], 128
    %v772 = vld [vmem:[%s771] sm:$0xff]
    %v773 = vld [vmem:[%s771 + $0x8] sm:$0xff]
    %v774 = vld [vmem:[%s771 + $0x10] sm:$0xff]
    %v775 = vld [vmem:[%s771 + $0x18] sm:$0xff]
    %v776 = vld [vmem:[%s771 + $0x20] sm:$0xff]
    %v777 = vld [vmem:[%s771 + $0x28] sm:$0xff]
    %v778 = vld [vmem:[%s771 + $0x30] sm:$0xff]
    %v779 = vld [vmem:[%s771 + $0x38] sm:$0xff]
    %v780 = vld [vmem:[%s771 + $0x40] sm:$0xff]
    %v781 = vld [vmem:[%s771 + $0x48] sm:$0xff]
    %v782 = vld [vmem:[%s771 + $0x50] sm:$0xff]
    %v783 = vld [vmem:[%s771 + $0x58] sm:$0xff]
    %v784 = vld [vmem:[%s771 + $0x60] sm:$0xff]
    %v785 = vld [vmem:[%s771 + $0x68] sm:$0xff]
    %v786 = vld [vmem:[%s771 + $0x70] sm:$0xff]
    %v787 = vld [vmem:[%s771 + $0x78] sm:$0xff]
    %788 = vmatprep.subr.mxu0 0.0
    %789 = vmatpush1.msra.mxu0 %v787
    %790 = vmatprep.subr.mxu0 0.0
    %791 = vmatpush1.msra.mxu0 %v786
    %792 = vmatprep.subr.mxu0 0.0
    %793 = vmatpush1.msra.mxu0 %v785
    %794 = vmatprep.subr.mxu0 0.0
    %795 = vmatpush1.msra.mxu0 %v784
    %796 = vmatprep.subr.mxu0 0.0
    %797 = vmatpush1.msra.mxu0 %v783
    %798 = vmatprep.subr.mxu0 0.0
    %799 = vmatpush1.msra.mxu0 %v782
    %800 = vmatprep.subr.mxu0 0.0
    %801 = vmatpush1.msra.mxu0 %v781
    %802 = vmatprep.subr.mxu0 0.0
    %803 = vmatpush1.msra.mxu0 %v780
    %804 = vmatprep.subr.mxu0 0.0
    %805 = vmatpush1.msra.mxu0 %v779
    %806 = vmatprep.subr.mxu0 0.0
    %807 = vmatpush1.msra.mxu0 %v778
    %808 = vmatprep.subr.mxu0 0.0
    %809 = vmatpush1.msra.mxu0 %v777
    %810 = vmatprep.subr.mxu0 0.0
    %811 = vmatpush1.msra.mxu0 %v776
    %812 = vmatprep.subr.mxu0 0.0
    %813 = vmatpush1.msra.mxu0 %v775
    %814 = vmatprep.subr.mxu0 0.0
    %815 = vmatpush1.msra.mxu0 %v774
    %816 = vmatprep.subr.mxu0 0.0
    %817 = vmatpush1.msra.mxu0 %v773
    %818 = vmatprep.subr.mxu0 0.0
    %819 = vmatpush1.msra.mxu0 %v772
    %820 = vmatprep.subr.mxu0 0.0
    %821 = vmatpush2.msra.mxu0 0.0
    %822 = vmatprep.subr.mxu0 0.0
    %823 = vmatpush2.msra.mxu0 0.0
    %824 = vmatprep.subr.mxu0 0.0
    %825 = vmatpush2.msra.mxu0 0.0
    %826 = vmatprep.subr.mxu0 0.0
    %827 = vmatpush2.msra.mxu0 0.0
    %828 = vmatprep.subr.mxu0 0.0
    %829 = vmatpush2.msra.mxu0 0.0
    %830 = vmatprep.subr.mxu0 0.0
    %831 = vmatpush2.msra.mxu0 0.0
    %832 = vmatprep.subr.mxu0 0.0
    %833 = vmatpush2.msra.mxu0 0.0
    %834 = vmatprep.subr.mxu0 0.0
    %835 = vmatpush2.msra.mxu0 0.0
    %836 = vmatprep.subr.mxu0 0.0
    %837 = vmatpush2.msra.mxu0 0.0
    %838 = vmatprep.subr.mxu0 0.0
    %839 = vmatpush2.msra.mxu0 0.0
    %840 = vmatprep.subr.mxu0 0.0
    %841 = vmatpush2.msra.mxu0 0.0
    %842 = vmatprep.subr.mxu0 0.0
    %843 = vmatpush2.msra.mxu0 0.0
    %844 = vmatprep.subr.mxu0 0.0
    %845 = vmatpush2.msra.mxu0 0.0
    %846 = vmatprep.subr.mxu0 0.0
    %847 = vmatpush2.msra.mxu0 0.0
    %848 = vmatprep.subr.mxu0 0.0
    %849 = vmatpush2.msra.mxu0 0.0
    %850 = vmatprep.subr.mxu0 0.0
    %851 = vmatpush2.msra.mxu0 0.0
    %852 = vmatprep.mubr.f32.mxu0 0.0
    %853 = vmatmul.mubr.f32.gmra.mxu0 %v767
    %v854 = vpop.f32.mrf.mxu0
    %v855 = vadd.f32 0.0, %v854
    %v856 = vpop.f32.mrf.mxu0
    %857 = vmatprep.mubr.f32.mxu0 0.0
    %858 = vmatmul.mubr.f32.gmra.mxu0 %v768
    %v859 = vpop.f32.mrf.mxu0
    %v860 = vadd.f32 0.0, %v859
    %v861 = vpop.f32.mrf.mxu0
    %862 = vmatprep.mubr.f32.mxu0 0.0
    %863 = vmatmul.mubr.f32.gmra.mxu0 %v769
    %v864 = vpop.f32.mrf.mxu0
    %v865 = vadd.f32 0.0, %v864
    %v866 = vpop.f32.mrf.mxu0
    %867 = vmatprep.mubr.f32.mxu0 0.0
    %868 = vmatmul.mubr.f32.gmra.mxu0 %v770
    %v869 = vpop.f32.mrf.mxu0
    %v870 = vadd.f32 0.0, %v869
    %v871 = vpop.f32.mrf.mxu0
    %872 = vdwg.mxu0
    %873 = vmatprep.subr.mxu0 0.0
    %874 = vmatpush1.msra.mxu0 %v766
    %875 = vmatprep.subr.mxu0 0.0
    %876 = vmatpush1.msra.mxu0 %v765
    %877 = vmatprep.subr.mxu0 0.0
    %878 = vmatpush1.msra.mxu0 %v764
    %879 = vmatprep.subr.mxu0 0.0
    %880 = vmatpush1.msra.mxu0 %v763
    %881 = vmatprep.subr.mxu0 0.0
    %882 = vmatpush1.msra.mxu0 %v762
    %883 = vmatprep.subr.mxu0 0.0
    %884 = vmatpush1.msra.mxu0 %v761
    %885 = vmatprep.subr.mxu0 0.0
    %886 = vmatpush1.msra.mxu0 %v760
    %887 = vmatprep.subr.mxu0 0.0
    %888 = vmatpush1.msra.mxu0 %v759
    %889 = vmatprep.subr.mxu0 0.0
    %890 = vmatpush1.msra.mxu0 %v758
    %891 = vmatprep.subr.mxu0 0.0
    %892 = vmatpush1.msra.mxu0 %v757
    %893 = vmatprep.subr.mxu0 0.0
    %894 = vmatpush1.msra.mxu0 %v756
    %895 = vmatprep.subr.mxu0 0.0
    %896 = vmatpush1.msra.mxu0 %v755
    %897 = vmatprep.subr.mxu0 0.0
    %898 = vmatpush1.msra.mxu0 %v754
    %899 = vmatprep.subr.mxu0 0.0
    %900 = vmatpush1.msra.mxu0 %v753
    %901 = vmatprep.subr.mxu0 0.0
    %902 = vmatpush1.msra.mxu0 %v752
    %903 = vmatprep.subr.mxu0 0.0
    %904 = vmatpush1.msra.mxu0 %v751
    %905 = vmatprep.subr.mxu0 0.0
    %906 = vmatpush2.msra.mxu0 0.0
    %907 = vmatprep.subr.mxu0 0.0
    %908 = vmatpush2.msra.mxu0 0.0
    %909 = vmatprep.subr.mxu0 0.0
    %910 = vmatpush2.msra.mxu0 0.0
    %911 = vmatprep.subr.mxu0 0.0
    %912 = vmatpush2.msra.mxu0 0.0
    %913 = vmatprep.subr.mxu0 0.0
    %914 = vmatpush2.msra.mxu0 0.0
    %915 = vmatprep.subr.mxu0 0.0
    %916 = vmatpush2.msra.mxu0 0.0
    %917 = vmatprep.subr.mxu0 0.0
    %918 = vmatpush2.msra.mxu0 0.0
    %919 = vmatprep.subr.mxu0 0.0
    %920 = vmatpush2.msra.mxu0 0.0
    %921 = vmatprep.subr.mxu0 0.0
    %922 = vmatpush2.msra.mxu0 0.0
    %923 = vmatprep.subr.mxu0 0.0
    %924 = vmatpush2.msra.mxu0 0.0
    %925 = vmatprep.subr.mxu0 0.0
    %926 = vmatpush2.msra.mxu0 0.0
    %927 = vmatprep.subr.mxu0 0.0
    %928 = vmatpush2.msra.mxu0 0.0
    %929 = vmatprep.subr.mxu0 0.0
    %930 = vmatpush2.msra.mxu0 0.0
    %931 = vmatprep.subr.mxu0 0.0
    %932 = vmatpush2.msra.mxu0 0.0
    %933 = vmatprep.subr.mxu0 0.0
    %934 = vmatpush2.msra.mxu0 0.0
    %935 = vmatprep.subr.mxu0 0.0
    %936 = vmatpush2.msra.mxu0 0.0
    %937 = vmatprep.mubr.f32.mxu0 0.0
    %938 = vmatmul.mubr.f32.gmra.mxu0 %v747
    %v939 = vpop.f32.mrf.mxu0
    %v940 = vadd.f32 %v855, %v939
    %v941 = vpop.f32.mrf.mxu0
    %942 = vmatprep.mubr.f32.mxu0 0.0
    %943 = vmatmul.mubr.f32.gmra.mxu0 %v748
    %v944 = vpop.f32.mrf.mxu0
    %v945 = vadd.f32 %v860, %v944
    %v946 = vpop.f32.mrf.mxu0
    %947 = vmatprep.mubr.f32.mxu0 0.0
    %948 = vmatmul.mubr.f32.gmra.mxu0 %v749
    %v949 = vpop.f32.mrf.mxu0
    %v950 = vadd.f32 %v865, %v949
    %v951 = vpop.f32.mrf.mxu0
    %952 = vmatprep.mubr.f32.mxu0 0.0
    %953 = vmatmul.mubr.f32.gmra.mxu0 %v750
    %v954 = vpop.f32.mrf.mxu0
    %v955 = vadd.f32 %v870, %v954
    %v956 = vpop.f32.mrf.mxu0
    %957 = vdwg.mxu0
    %v958 = vld [vmem:[#allocation2 + $0x2] sm:$0xff]
    %v959 = vld [vmem:[#allocation2 + $0xa] sm:$0xff]
    %v960 = vld [vmem:[#allocation2 + $0x1a] sm:$0xff]
    %v961 = vld [vmem:[#allocation2 + $0x22] sm:$0xff]
    %s962 = scalar_lea.vmem [#allocation6], 256
    %v963 = vld [vmem:[%s962] sm:$0xff]
    %v964 = vld [vmem:[%s962 + $0x8] sm:$0xff]
    %v965 = vld [vmem:[%s962 + $0x10] sm:$0xff]
    %v966 = vld [vmem:[%s962 + $0x18] sm:$0xff]
    %v967 = vld [vmem:[%s962 + $0x20] sm:$0xff]
    %v968 = vld [vmem:[%s962 + $0x28] sm:$0xff]
    %v969 = vld [vmem:[%s962 + $0x30] sm:$0xff]
    %v970 = vld [vmem:[%s962 + $0x38] sm:$0xff]
    %v971 = vld [vmem:[%s962 + $0x40] sm:$0xff]
    %v972 = vld [vmem:[%s962 + $0x48] sm:$0xff]
    %v973 = vld [vmem:[%s962 + $0x50] sm:$0xff]
    %v974 = vld [vmem:[%s962 + $0x58] sm:$0xff]
    %v975 = vld [vmem:[%s962 + $0x60] sm:$0xff]
    %v976 = vld [vmem:[%s962 + $0x68] sm:$0xff]
    %v977 = vld [vmem:[%s962 + $0x70] sm:$0xff]
    %v978 = vld [vmem:[%s962 + $0x78] sm:$0xff]
    %979 = vmatprep.subr.mxu0 0.0
    %980 = vmatpush1.msra.mxu0 %v978
    %981 = vmatprep.subr.mxu0 0.0
    %982 = vmatpush1.msra.mxu0 %v977
    %983 = vmatprep.subr.mxu0 0.0
    %984 = vmatpush1.msra.mxu0 %v976
    %985 = vmatprep.subr.mxu0 0.0
    %986 = vmatpush1.msra.mxu0 %v975
    %987 = vmatprep.subr.mxu0 0.0
    %988 = vmatpush1.msra.mxu0 %v974
    %989 = vmatprep.subr.mxu0 0.0
    %990 = vmatpush1.msra.mxu0 %v973
    %991 = vmatprep.subr.mxu0 0.0
    %992 = vmatpush1.msra.mxu0 %v972
    %993 = vmatprep.subr.mxu0 0.0
    %994 = vmatpush1.msra.mxu0 %v971
    %995 = vmatprep.subr.mxu0 0.0
    %996 = vmatpush1.msra.mxu0 %v970
    %997 = vmatprep.subr.mxu0 0.0
    %998 = vmatpush1.msra.mxu0 %v969
    %999 = vmatprep.subr.mxu0 0.0
    %1000 = vmatpush1.msra.mxu0 %v968
    %1001 = vmatprep.subr.mxu0 0.0
    %1002 = vmatpush1.msra.mxu0 %v967
    %1003 = vmatprep.subr.mxu0 0.0
    %1004 = vmatpush1.msra.mxu0 %v966
    %1005 = vmatprep.subr.mxu0 0.0
    %1006 = vmatpush1.msra.mxu0 %v965
    %1007 = vmatprep.subr.mxu0 0.0
    %1008 = vmatpush1.msra.mxu0 %v964
    %1009 = vmatprep.subr.mxu0 0.0
    %1010 = vmatpush1.msra.mxu0 %v963
    %1011 = vmatprep.subr.mxu0 0.0
    %1012 = vmatpush2.msra.mxu0 0.0
    %1013 = vmatprep.subr.mxu0 0.0
    %1014 = vmatpush2.msra.mxu0 0.0
    %1015 = vmatprep.subr.mxu0 0.0
    %1016 = vmatpush2.msra.mxu0 0.0
    %1017 = vmatprep.subr.mxu0 0.0
    %1018 = vmatpush2.msra.mxu0 0.0
    %1019 = vmatprep.subr.mxu0 0.0
    %1020 = vmatpush2.msra.mxu0 0.0
    %1021 = vmatprep.subr.mxu0 0.0
    %1022 = vmatpush2.msra.mxu0 0.0
    %1023 = vmatprep.subr.mxu0 0.0
    %1024 = vmatpush2.msra.mxu0 0.0
    %1025 = vmatprep.subr.mxu0 0.0
    %1026 = vmatpush2.msra.mxu0 0.0
    %1027 = vmatprep.subr.mxu0 0.0
    %1028 = vmatpush2.msra.mxu0 0.0
    %1029 = vmatprep.subr.mxu0 0.0
    %1030 = vmatpush2.msra.mxu0 0.0
    %1031 = vmatprep.subr.mxu0 0.0
    %1032 = vmatpush2.msra.mxu0 0.0
    %1033 = vmatprep.subr.mxu0 0.0
    %1034 = vmatpush2.msra.mxu0 0.0
    %1035 = vmatprep.subr.mxu0 0.0
    %1036 = vmatpush2.msra.mxu0 0.0
    %1037 = vmatprep.subr.mxu0 0.0
    %1038 = vmatpush2.msra.mxu0 0.0
    %1039 = vmatprep.subr.mxu0 0.0
    %1040 = vmatpush2.msra.mxu0 0.0
    %1041 = vmatprep.subr.mxu0 0.0
    %1042 = vmatpush2.msra.mxu0 0.0
    %1043 = vmatprep.mubr.f32.mxu0 0.0
    %1044 = vmatmul.mubr.f32.gmra.mxu0 %v958
    %v1045 = vpop.f32.mrf.mxu0
    %v1046 = vadd.f32 0.0, %v1045
    %v1047 = vpop.f32.mrf.mxu0
    %1048 = vmatprep.mubr.f32.mxu0 0.0
    %1049 = vmatmul.mubr.f32.gmra.mxu0 %v959
    %v1050 = vpop.f32.mrf.mxu0
    %v1051 = vadd.f32 0.0, %v1050
    %v1052 = vpop.f32.mrf.mxu0
    %1053 = vmatprep.mubr.f32.mxu0 0.0
    %1054 = vmatmul.mubr.f32.gmra.mxu0 %v960
    %v1055 = vpop.f32.mrf.mxu0
    %v1056 = vadd.f32 0.0, %v1055
    %v1057 = vpop.f32.mrf.mxu0
    %1058 = vmatprep.mubr.f32.mxu0 0.0
    %1059 = vmatmul.mubr.f32.gmra.mxu0 %v961
    %v1060 = vpop.f32.mrf.mxu0
    %v1061 = vadd.f32 0.0, %v1060
    %v1062 = vpop.f32.mrf.mxu0
    %1063 = vdwg.mxu0
    %v1064 = vadd.f32 %v940, %v1046
    %v1065 = vadd.f32 %v945, %v1051
    %v1066 = vadd.f32 %v950, %v1056
    %v1067 = vadd.f32 %v955, %v1061
    %v1068 = vadd.f32 %v1064, %v1065
    %v1069 = vadd.f32 %v1068, %v1066
    %v1070 = vadd.f32 %v1069, %v1067
    %v1071 = vrot.slane %v1070, 4
    %v1072 = vadd.f32 %v1070, %v1071
    %v1073 = vrot.slane %v1072, 2
    %v1074 = vadd.f32 %v1072, %v1073
    %v1075 = vrot.slane %v1074, 1
    %v1076 = vadd.f32 %v1074, %v1075
    %v1077 = vmul.f32 %v1064, %v1064
    %v1078 = vmul.f32 %v1065, %v1065
    %v1079 = vmul.f32 %v1066, %v1066
    %v1080 = vmul.f32 %v1067, %v1067
    %v1081 = vadd.f32 %v1077, %v1078
    %v1082 = vadd.f32 %v1081, %v1079
    %v1083 = vadd.f32 %v1082, %v1080
    %v1084 = vrot.slane %v1083, 4
    %v1085 = vadd.f32 %v1083, %v1084
    %v1086 = vrot.slane %v1085, 2
    %v1087 = vadd.f32 %v1085, %v1086
    %v1088 = vrot.slane %v1087, 1
    %v1089 = vadd.f32 %v1087, %v1088
    %v1090 = vld [vmem:[%s3] sm:$0xff]
    %v1091 = vld [vmem:[%s3 + $0x8] sm:$0xff]
    %v1092 = vld [vmem:[%s3 + $0x10] sm:$0xff]
    %v1093 = vld [vmem:[%s3 + $0x18] sm:$0xff]
    %v1094 = vld [vmem:[%s3 + $0x20] sm:$0xff]
    %v1095 = vld [vmem:[%s3 + $0x28] sm:$0xff]
    %v1096 = vld [vmem:[%s3 + $0x30] sm:$0xff]
    %v1097 = vld [vmem:[%s3 + $0x38] sm:$0xff]
    %v1098 = vld [vmem:[%s3 + $0x40] sm:$0xff]
    %v1099 = vld [vmem:[%s3 + $0x48] sm:$0xff]
    %v1100 = vld [vmem:[%s3 + $0x50] sm:$0xff]
    %v1101 = vld [vmem:[%s3 + $0x58] sm:$0xff]
    %v1102 = vld [vmem:[%s3 + $0x60] sm:$0xff]
    %v1103 = vld [vmem:[%s3 + $0x68] sm:$0xff]
    %v1104 = vld [vmem:[%s3 + $0x70] sm:$0xff]
    %v1105 = vld [vmem:[%s3 + $0x78] sm:$0xff]
    %1106 = vmatprep.subr.mxu0 0.0
    %1107 = vmatpush1.msra.mxu0 %v1105
    %1108 = vmatprep.subr.mxu0 0.0
    %1109 = vmatpush1.msra.mxu0 %v1104
    %1110 = vmatprep.subr.mxu0 0.0
    %1111 = vmatpush1.msra.mxu0 %v1103
    %1112 = vmatprep.subr.mxu0 0.0
    %1113 = vmatpush1.msra.mxu0 %v1102
    %1114 = vmatprep.subr.mxu0 0.0
    %1115 = vmatpush1.msra.mxu0 %v1101
    %1116 = vmatprep.subr.mxu0 0.0
    %1117 = vmatpush1.msra.mxu0 %v1100
    %1118 = vmatprep.subr.mxu0 0.0
    %1119 = vmatpush1.msra.mxu0 %v1099
    %1120 = vmatprep.subr.mxu0 0.0
    %1121 = vmatpush1.msra.mxu0 %v1098
    %1122 = vmatprep.subr.mxu0 0.0
    %1123 = vmatpush1.msra.mxu0 %v1097
    %1124 = vmatprep.subr.mxu0 0.0
    %1125 = vmatpush1.msra.mxu0 %v1096
    %1126 = vmatprep.subr.mxu0 0.0
    %1127 = vmatpush1.msra.mxu0 %v1095
    %1128 = vmatprep.subr.mxu0 0.0
    %1129 = vmatpush1.msra.mxu0 %v1094
    %1130 = vmatprep.subr.mxu0 0.0
    %1131 = vmatpush1.msra.mxu0 %v1093
    %1132 = vmatprep.subr.mxu0 0.0
    %1133 = vmatpush1.msra.mxu0 %v1092
    %1134 = vmatprep.subr.mxu0 0.0
    %1135 = vmatpush1.msra.mxu0 %v1091
    %1136 = vmatprep.subr.mxu0 0.0
    %1137 = vmatpush1.msra.mxu0 %v1090
    %1138 = vmatprep.subr.mxu0 0.0
    %1139 = vmatpush2.msra.mxu0 0.0
    %1140 = vmatprep.subr.mxu0 0.0
    %1141 = vmatpush2.msra.mxu0 0.0
    %1142 = vmatprep.subr.mxu0 0.0
    %1143 = vmatpush2.msra.mxu0 0.0
    %1144 = vmatprep.subr.mxu0 0.0
    %1145 = vmatpush2.msra.mxu0 0.0
    %1146 = vmatprep.subr.mxu0 0.0
    %1147 = vmatpush2.msra.mxu0 0.0
    %1148 = vmatprep.subr.mxu0 0.0
    %1149 = vmatpush2.msra.mxu0 0.0
    %1150 = vmatprep.subr.mxu0 0.0
    %1151 = vmatpush2.msra.mxu0 0.0
    %1152 = vmatprep.subr.mxu0 0.0
    %1153 = vmatpush2.msra.mxu0 0.0
    %1154 = vmatprep.subr.mxu0 0.0
    %1155 = vmatpush2.msra.mxu0 0.0
    %1156 = vmatprep.subr.mxu0 0.0
    %1157 = vmatpush2.msra.mxu0 0.0
    %1158 = vmatprep.subr.mxu0 0.0
    %1159 = vmatpush2.msra.mxu0 0.0
    %1160 = vmatprep.subr.mxu0 0.0
    %1161 = vmatpush2.msra.mxu0 0.0
    %1162 = vmatprep.subr.mxu0 0.0
    %1163 = vmatpush2.msra.mxu0 0.0
    %1164 = vmatprep.subr.mxu0 0.0
    %1165 = vmatpush2.msra.mxu0 0.0
    %1166 = vmatprep.subr.mxu0 0.0
    %1167 = vmatpush2.msra.mxu0 0.0
    %1168 = vmatprep.subr.mxu0 0.0
    %1169 = vmatpush2.msra.mxu0 0.0
    %1170 = vmatprep.mubr.f32.mxu0 0.0
    %1171 = vmatmul.mubr.f32.gmra.mxu0 %v1076
    %v1172 = vpop.f32.mrf.mxu0
    %v1173 = vadd.f32 0.0, %v1172
    %v1174 = vpop.f32.mrf.mxu0
    %1175 = vdwg.mxu0
    %v1176 = vmul.f32 %v1173, 0.001953125
    %1177 = vmatprep.subr.mxu0 0.0
    %1178 = vmatpush1.msra.mxu0 %v1105
    %1179 = vmatprep.subr.mxu0 0.0
    %1180 = vmatpush1.msra.mxu0 %v1104
    %1181 = vmatprep.subr.mxu0 0.0
    %1182 = vmatpush1.msra.mxu0 %v1103
    %1183 = vmatprep.subr.mxu0 0.0
    %1184 = vmatpush1.msra.mxu0 %v1102
    %1185 = vmatprep.subr.mxu0 0.0
    %1186 = vmatpush1.msra.mxu0 %v1101
    %1187 = vmatprep.subr.mxu0 0.0
    %1188 = vmatpush1.msra.mxu0 %v1100
    %1189 = vmatprep.subr.mxu0 0.0
    %1190 = vmatpush1.msra.mxu0 %v1099
    %1191 = vmatprep.subr.mxu0 0.0
    %1192 = vmatpush1.msra.mxu0 %v1098
    %1193 = vmatprep.subr.mxu0 0.0
    %1194 = vmatpush1.msra.mxu0 %v1097
    %1195 = vmatprep.subr.mxu0 0.0
    %1196 = vmatpush1.msra.mxu0 %v1096
    %1197 = vmatprep.subr.mxu0 0.0
    %1198 = vmatpush1.msra.mxu0 %v1095
    %1199 = vmatprep.subr.mxu0 0.0
    %1200 = vmatpush1.msra.mxu0 %v1094
    %1201 = vmatprep.subr.mxu0 0.0
    %1202 = vmatpush1.msra.mxu0 %v1093
    %1203 = vmatprep.subr.mxu0 0.0
    %1204 = vmatpush1.msra.mxu0 %v1092
    %1205 = vmatprep.subr.mxu0 0.0
    %1206 = vmatpush1.msra.mxu0 %v1091
    %1207 = vmatprep.subr.mxu0 0.0
    %1208 = vmatpush1.msra.mxu0 %v1090
    %1209 = vmatprep.subr.mxu0 0.0
    %1210 = vmatpush2.msra.mxu0 0.0
    %1211 = vmatprep.subr.mxu0 0.0
    %1212 = vmatpush2.msra.mxu0 0.0
    %1213 = vmatprep.subr.mxu0 0.0
    %1214 = vmatpush2.msra.mxu0 0.0
    %1215 = vmatprep.subr.mxu0 0.0
    %1216 = vmatpush2.msra.mxu0 0.0
    %1217 = vmatprep.subr.mxu0 0.0
    %1218 = vmatpush2.msra.mxu0 0.0
    %1219 = vmatprep.subr.mxu0 0.0
    %1220 = vmatpush2.msra.mxu0 0.0
    %1221 = vmatprep.subr.mxu0 0.0
    %1222 = vmatpush2.msra.mxu0 0.0
    %1223 = vmatprep.subr.mxu0 0.0
    %1224 = vmatpush2.msra.mxu0 0.0
    %1225 = vmatprep.subr.mxu0 0.0
    %1226 = vmatpush2.msra.mxu0 0.0
    %1227 = vmatprep.subr.mxu0 0.0
    %1228 = vmatpush2.msra.mxu0 0.0
    %1229 = vmatprep.subr.mxu0 0.0
    %1230 = vmatpush2.msra.mxu0 0.0
    %1231 = vmatprep.subr.mxu0 0.0
    %1232 = vmatpush2.msra.mxu0 0.0
    %1233 = vmatprep.subr.mxu0 0.0
    %1234 = vmatpush2.msra.mxu0 0.0
    %1235 = vmatprep.subr.mxu0 0.0
    %1236 = vmatpush2.msra.mxu0 0.0
    %1237 = vmatprep.subr.mxu0 0.0
    %1238 = vmatpush2.msra.mxu0 0.0
    %1239 = vmatprep.subr.mxu0 0.0
    %1240 = vmatpush2.msra.mxu0 0.0
    %1241 = vmatprep.mubr.f32.mxu0 0.0
    %1242 = vmatmul.mubr.f32.gmra.mxu0 %v1089
    %v1243 = vpop.f32.mrf.mxu0
    %v1244 = vadd.f32 0.0, %v1243
    %v1245 = vpop.f32.mrf.mxu0
    %1246 = vdwg.mxu0
    %v1247 = vmul.f32 %v1244, 0.001953125
    %v1248 = vmul.f32 %v1176, %v1176
    %v1249 = vsub.f32 %v1247, %v1248
    %v1250 = vld [vmem:[%s7] sm:$0x1]
    %v1251 = vadd.f32 %v1249, 1e-05
    %v1252 = vrsqrt.pop %v1251
    %v1253 = vmul.f32 %v1250, %v1252
    %v1254 = vld [vmem:[%s8] sm:$0x1]
    %v1255 = vmul.f32 %v1176, %v1253
    %v1256 = vsub.f32 %v1254, %v1255
    %v1257 = vld [vmem:[%s4] sm:$0xff]
    %v1259 = vsel %vm572, %v1253, 0
    %1261 = vmatprep.subr.mxu0 0.0
    %1262 = vmatpush1.msra.mxu0 0.0
    %1263 = vmatprep.subr.mxu0 0.0
    %1264 = vmatpush1.msra.mxu0 0.0
    %1265 = vmatprep.subr.mxu0 0.0
    %1266 = vmatpush1.msra.mxu0 0.0
    %1267 = vmatprep.subr.mxu0 0.0
    %1268 = vmatpush1.msra.mxu0 0.0
    %1269 = vmatprep.subr.mxu0 0.0
    %1270 = vmatpush1.msra.mxu0 0.0
    %1271 = vmatprep.subr.mxu0 0.0
    %1272 = vmatpush1.msra.mxu0 0.0
    %1273 = vmatprep.subr.mxu0 0.0
    %1274 = vmatpush1.msra.mxu0 0.0
    %1275 = vmatprep.subr.mxu0 0.0
    %1276 = vmatpush1.msra.mxu0 0.0
    %1277 = vmatprep.subr.mxu0 0.0
    %1278 = vmatpush1.msra.mxu0 0.0
    %1279 = vmatprep.subr.mxu0 0.0
    %1280 = vmatpush1.msra.mxu0 0.0
    %1281 = vmatprep.subr.mxu0 0.0
    %1282 = vmatpush1.msra.mxu0 0.0
    %1283 = vmatprep.subr.mxu0 0.0
    %1284 = vmatpush1.msra.mxu0 0.0
    %1285 = vmatprep.subr.mxu0 0.0
    %1286 = vmatpush1.msra.mxu0 0.0
    %1287 = vmatprep.subr.mxu0 0.0
    %1288 = vmatpush1.msra.mxu0 0.0
    %1289 = vmatprep.subr.mxu0 0.0
    %1290 = vmatpush1.msra.mxu0 0.0
    %1291 = vmatprep.subr.mxu0 0.0
    %1292 = vmatpush1.msra.mxu0 %v1257
    %1293 = vmatprep.subr.mxu0 0.0
    %1294 = vmatpush2.msra.mxu0 0.0
    %1295 = vmatprep.subr.mxu0 0.0
    %1296 = vmatpush2.msra.mxu0 0.0
    %1297 = vmatprep.subr.mxu0 0.0
    %1298 = vmatpush2.msra.mxu0 0.0
    %1299 = vmatprep.subr.mxu0 0.0
    %1300 = vmatpush2.msra.mxu0 0.0
    %1301 = vmatprep.subr.mxu0 0.0
    %1302 = vmatpush2.msra.mxu0 0.0
    %1303 = vmatprep.subr.mxu0 0.0
    %1304 = vmatpush2.msra.mxu0 0.0
    %1305 = vmatprep.subr.mxu0 0.0
    %1306 = vmatpush2.msra.mxu0 0.0
    %1307 = vmatprep.subr.mxu0 0.0
    %1308 = vmatpush2.msra.mxu0 0.0
    %1309 = vmatprep.subr.mxu0 0.0
    %1310 = vmatpush2.msra.mxu0 0.0
    %1311 = vmatprep.subr.mxu0 0.0
    %1312 = vmatpush2.msra.mxu0 0.0
    %1313 = vmatprep.subr.mxu0 0.0
    %1314 = vmatpush2.msra.mxu0 0.0
    %1315 = vmatprep.subr.mxu0 0.0
    %1316 = vmatpush2.msra.mxu0 0.0
    %1317 = vmatprep.subr.mxu0 0.0
    %1318 = vmatpush2.msra.mxu0 0.0
    %1319 = vmatprep.subr.mxu0 0.0
    %1320 = vmatpush2.msra.mxu0 0.0
    %1321 = vmatprep.subr.mxu0 0.0
    %1322 = vmatpush2.msra.mxu0 0.0
    %1323 = vmatprep.subr.mxu0 0.0
    %1324 = vmatpush2.msra.mxu0 0.0
    %1325 = vmatprep.mubr.f32.mxu0 0.0
    %1326 = vmatmul.mubr.f32.gmra.mxu0 %v1259
    %v1327 = vpop.f32.mrf.mxu0
    %v1328 = vadd.f32 0.0, %v1327
    %v1329 = vpop.f32.mrf.mxu0
    %1330 = vdwg.mxu0
    %v1332 = vsel %vm572, %v1256, 0
    %1334 = vmatprep.subr.mxu0 0.0
    %1335 = vmatpush1.msra.mxu0 0.0
    %1336 = vmatprep.subr.mxu0 0.0
    %1337 = vmatpush1.msra.mxu0 0.0
    %1338 = vmatprep.subr.mxu0 0.0
    %1339 = vmatpush1.msra.mxu0 0.0
    %1340 = vmatprep.subr.mxu0 0.0
    %1341 = vmatpush1.msra.mxu0 0.0
    %1342 = vmatprep.subr.mxu0 0.0
    %1343 = vmatpush1.msra.mxu0 0.0
    %1344 = vmatprep.subr.mxu0 0.0
    %1345 = vmatpush1.msra.mxu0 0.0
    %1346 = vmatprep.subr.mxu0 0.0
    %1347 = vmatpush1.msra.mxu0 0.0
    %1348 = vmatprep.subr.mxu0 0.0
    %1349 = vmatpush1.msra.mxu0 0.0
    %1350 = vmatprep.subr.mxu0 0.0
    %1351 = vmatpush1.msra.mxu0 0.0
    %1352 = vmatprep.subr.mxu0 0.0
    %1353 = vmatpush1.msra.mxu0 0.0
    %1354 = vmatprep.subr.mxu0 0.0
    %1355 = vmatpush1.msra.mxu0 0.0
    %1356 = vmatprep.subr.mxu0 0.0
    %1357 = vmatpush1.msra.mxu0 0.0
    %1358 = vmatprep.subr.mxu0 0.0
    %1359 = vmatpush1.msra.mxu0 0.0
    %1360 = vmatprep.subr.mxu0 0.0
    %1361 = vmatpush1.msra.mxu0 0.0
    %1362 = vmatprep.subr.mxu0 0.0
    %1363 = vmatpush1.msra.mxu0 0.0
    %1364 = vmatprep.subr.mxu0 0.0
    %1365 = vmatpush1.msra.mxu0 %v1257
    %1366 = vmatprep.subr.mxu0 0.0
    %1367 = vmatpush2.msra.mxu0 0.0
    %1368 = vmatprep.subr.mxu0 0.0
    %1369 = vmatpush2.msra.mxu0 0.0
    %1370 = vmatprep.subr.mxu0 0.0
    %1371 = vmatpush2.msra.mxu0 0.0
    %1372 = vmatprep.subr.mxu0 0.0
    %1373 = vmatpush2.msra.mxu0 0.0
    %1374 = vmatprep.subr.mxu0 0.0
    %1375 = vmatpush2.msra.mxu0 0.0
    %1376 = vmatprep.subr.mxu0 0.0
    %1377 = vmatpush2.msra.mxu0 0.0
    %1378 = vmatprep.subr.mxu0 0.0
    %1379 = vmatpush2.msra.mxu0 0.0
    %1380 = vmatprep.subr.mxu0 0.0
    %1381 = vmatpush2.msra.mxu0 0.0
    %1382 = vmatprep.subr.mxu0 0.0
    %1383 = vmatpush2.msra.mxu0 0.0
    %1384 = vmatprep.subr.mxu0 0.0
    %1385 = vmatpush2.msra.mxu0 0.0
    %1386 = vmatprep.subr.mxu0 0.0
    %1387 = vmatpush2.msra.mxu0 0.0
    %1388 = vmatprep.subr.mxu0 0.0
    %1389 = vmatpush2.msra.mxu0 0.0
    %1390 = vmatprep.subr.mxu0 0.0
    %1391 = vmatpush2.msra.mxu0 0.0
    %1392 = vmatprep.subr.mxu0 0.0
    %1393 = vmatpush2.msra.mxu0 0.0
    %1394 = vmatprep.subr.mxu0 0.0
    %1395 = vmatpush2.msra.mxu0 0.0
    %1396 = vmatprep.subr.mxu0 0.0
    %1397 = vmatpush2.msra.mxu0 0.0
    %1398 = vmatprep.mubr.f32.mxu0 0.0
    %1399 = vmatmul.mubr.f32.gmra.mxu0 %v1332
    %v1400 = vpop.f32.mrf.mxu0
    %v1401 = vadd.f32 0.0, %v1400
    %v1402 = vpop.f32.mrf.mxu0
    %1403 = vdwg.mxu0
    %v1404 = vlaneseq
    %v1405 = vshrl.u32 %v1404, 7
    %v1406 = vsub.s32 0, %v1405
    %v1407 = vrot.slane %v1328, %v1406
    %v1408 = vmul.f32 %v1064, %v1407
    %v1409 = vmul.f32 %v1065, %v1407
    %v1410 = vmul.f32 %v1066, %v1407
    %v1411 = vmul.f32 %v1067, %v1407
    %v1412 = vlaneseq
    %v1413 = vshrl.u32 %v1412, 7
    %v1414 = vsub.s32 0, %v1413
    %v1415 = vrot.slane %v1401, %v1414
    %v1416 = vadd.f32 %v1408, %v1415
    %v1417 = vadd.f32 %v1409, %v1415
    %v1418 = vadd.f32 %v1410, %v1415
    %v1419 = vadd.f32 %v1411, %v1415
    %v1420 = vmax.f32 %v1416, 0.0
    %v1421 = vmax.f32 %v1417, 0.0
    %v1422 = vmax.f32 %v1418, 0.0
    %v1423 = vmax.f32 %v1419, 0.0
    %v1424 = vld [vmem:[%s0 + $0x1] sm:$0xff]
    %v1425 = vld [vmem:[%s0 + $0x9] sm:$0xff]
    %v1426 = vld [vmem:[%s0 + $0x19] sm:$0xff]
    %v1427 = vld [vmem:[%s0 + $0x21] sm:$0xff]
    %v1428 = vadd.f32 %v1424, %v1420
    %v1429 = vadd.f32 %v1425, %v1421
    %v1430 = vadd.f32 %v1426, %v1422
    %v1431 = vadd.f32 %v1427, %v1423
    %v1432 = vmax.f32 %v1428, 0.0
    %v1433 = vmax.f32 %v1429, 0.0
    %v1434 = vmax.f32 %v1430, 0.0
    %v1435 = vmax.f32 %v1431, 0.0
    %1436 = vst [vmem:[#allocation8] sm:$0xff] %v1432
    %1437 = vst [vmem:[#allocation8 + $0x8] sm:$0xff] %v1433
    %1438 = vst [vmem:[#allocation8 + $0x10] sm:$0xff] %v1434
    %1439 = vst [vmem:[#allocation8 + $0x18] sm:$0xff] %v1435
    // Predicated region
    $region46: #{tpu_custom_call.1} parent=1 // pred_check
      _
    $region47: #{tpu_custom_call.1} parent=1 // pred_check_branch
      %1441 = sbr.rel (0) target = $region49
    $region48: #{tpu_custom_call.1} parent=1 // pred_region
      %s1443 = ssub.s32 512, 512
      %1444 = vsyncadd [#allocation5], %s1443
      %s1445 = sshll.u32 [#allocation8], 4
      %s1446 = int_to_ptr.vmem [resolvable:$true] %s1445
      %1451 = dma.vmem_to_hbm [thread:$0]  %s1446, 512, %s9, [#allocation5], 128, 128, 8
    $region49: #{tpu_custom_call.1} parent=1 // pred_fallthru
      _
    // Predicated region
    $region50: #{tpu_custom_call.1} parent=1 // pred_check
      _
    $region51: #{tpu_custom_call.1} parent=1 // pred_check_branch
      %1453 = sbr.rel (0) target = $region53
    $region52: #{tpu_custom_call.1} parent=1 // pred_region
      %1454 = dma.done [#allocation5], 512
    $region53: #{tpu_custom_call.1} parent=1 // pred_fallthru
      _
    %1455 = vsyncpa [#allocation4], 1
    %1456 = vsyncpa [#allocation7], 1
    %1457 = vsyncpa [#allocation5], 1

</llo_original>
